<compile_context>
chip_gen: v7x
topology: tpu7x:2x2x1
jax: 0.10.0
libtpu: 0.0.40
codegen_flags: <defaults>
</compile_context>

<pallas_src>
import functools
import math

import jax
import jax.numpy as jnp
from jax.experimental import pallas as pl
from jax.experimental.pallas import tpu as pltpu


_VMEM_LIMIT_BYTES = 32 * 1024 * 1024      # explicit scoped-VMEM budget (all gens)
_RESIDENT_B_MAX_BYTES = 8 * 1024 * 1024   # per-slab cap for the resident S operand


def _round_up(x, m):
    return ((x + m - 1) // m) * m


def _pick_tile(dim, candidates=(512, 256, 128)):
    """Largest candidate tile that divides the (already 128-padded) dim."""
    for c in candidates:
        if dim % c == 0:
            return c
    return dim


def _gemm_bias_kernel(a_ref, b_ref, bias_ref, o_ref, acc_ref):
    """Tiled C = A @ B + bias.  B block is (tk, tn), streamed per k step."""
    k = pl.program_id(2)

    @pl.when(k == 0)
    def _():
        acc_ref[...] = jnp.zeros_like(acc_ref)

    acc_ref[...] += jnp.dot(a_ref[...], b_ref[...],
                            preferred_element_type=jnp.float32)

    @pl.when(k == pl.num_programs(2) - 1)
    def _():
        # Bias added once, in f32, at the finalize step.
        o_ref[...] = (acc_ref[...] + bias_ref[...]).astype(o_ref.dtype)


def _gemm_bias_resident_b_kernel(tk, a_ref, b_ref, bias_ref, o_ref, acc_ref):
    """Same computation, but b_ref holds the full (K, tn) slab resident in
    VMEM (constant block index => DMA'd from HBM once); the current k-chunk
    is sliced in-kernel."""
    k = pl.program_id(2)

    @pl.when(k == 0)
    def _():
        acc_ref[...] = jnp.zeros_like(acc_ref)

    k0 = pl.multiple_of(k * tk, tk)
    acc_ref[...] += jnp.dot(a_ref[...], b_ref[pl.ds(k0, tk), :],
                            preferred_element_type=jnp.float32)

    @pl.when(k == pl.num_programs(2) - 1)
    def _():
        o_ref[...] = (acc_ref[...] + bias_ref[...]).astype(o_ref.dtype)


def _gcn_matmul(a, b, bias, *, tm, tn, tk, out_dtype, allow_resident_b=True):
    """C = A @ B + bias.  A:(M,K), B:(K,N), bias:(1,N) f32.
    Caller guarantees M % tm == N % tn == K % tk == 0 (via padding)."""
    M, K = a.shape
    K2, N = b.shape
    assert K == K2
    assert M % tm == 0 and N % tn == 0 and K % tk == 0
    assert bias.shape == (1, N)

    i_blocks, j_blocks, k_blocks = M // tm, N // tn, K // tk
    grid = (i_blocks, j_blocks, k_blocks)

    # Resident-B: single column block and small enough slab -> B is DMA'd
    # exactly once for the whole grid instead of once per row tile.
    resident_b = (allow_resident_b
                  and j_blocks == 1
                  and K * tn * b.dtype.itemsize <= _RESIDENT_B_MAX_BYTES)

    a_spec = pl.BlockSpec((tm, tk), lambda i, j, k: (i, k))
    bias_spec = pl.BlockSpec((1, tn), lambda i, j, k: (0, j))
    o_spec = pl.BlockSpec((tm, tn), lambda i, j, k: (i, j))

    if resident_b:
        b_spec = pl.BlockSpec((K, tn), lambda i, j, k: (0, j))
        kernel = functools.partial(_gemm_bias_resident_b_kernel, tk)
        b_bytes = K * N * b.dtype.itemsize                     # read once
    else:
        b_spec = pl.BlockSpec((tk, tn), lambda i, j, k: (k, j))
        kernel = _gemm_bias_kernel
        b_bytes = K * N * b.dtype.itemsize * i_blocks           # re-read per row tile

    cost = pl.CostEstimate(
        flops=2 * M * N * K,
        transcendentals=0,
        bytes_accessed=(M * K * a.dtype.itemsize * j_blocks      # A re-read per j
                        + b_bytes
                        + N * bias.dtype.itemsize * i_blocks
                        + M * N * jnp.dtype(out_dtype).itemsize),
    )

    return pl.pallas_call(
        kernel,
        out_shape=jax.ShapeDtypeStruct((M, N), out_dtype),
        grid_spec=pltpu.PrefetchScalarGridSpec(
            num_scalar_prefetch=0,
            grid=grid,
            in_specs=[a_spec, b_spec, bias_spec],
            out_specs=o_spec,
            scratch_shapes=[pltpu.VMEM((tm, tn), jnp.float32)]),
        compiler_params=pltpu.CompilerParams(
            dimension_semantics=("parallel", "parallel", "arbitrary"),
            vmem_limit_bytes=_VMEM_LIMIT_BYTES),
        cost_estimate=cost,
    )(a, b, bias)


def graph_convolution(x, adj, weight, bias=None, *,
                      compute_dtype=jnp.bfloat16,
                      tm=512, tk=512,
                      resident_s=True):
    """Pallas GCN forward: adj @ (x @ weight) (+ bias).

    x:      (N, in_features)
    adj:    (N, N)
    weight: (in_features, out_features)
    bias:   (out_features,) or None
    compute_dtype: matmul-input dtype for both stages (default bf16; halves
        the dominant adjacency HBM stream and hits native MXU rate on
        v5e/v6e/v7x).  Accumulation is always f32.  Use jnp.float32 for an
        exact match with an f32 reference (bf16 output differs at ~1e-3 rel).
    tm, tk: stage-2 row / reduction tile sizes for adj @ S (multiples of 128).
    resident_s: allow the intermediate S to stay resident in VMEM for stage 2
        (auto-gated on an 8 MiB slab cap; falls back to tiled streaming).
    """
    n, in_f = x.shape
    out_f = weight.shape[1]
    out_dtype = x.dtype
    in_dt = jnp.dtype(compute_dtype)

    assert tm % 128 == 0 and tk % 128 == 0

    # Decoupled padding of N's two roles in stage 2: rows -> tm, reduction -> tk.
    n_row_pad = _round_up(n, tm)
    n_red_pad = _round_up(n, tk)
    # Feature dims only need the 128-lane quantum (keeps stage 1 small and the
    # output last dim lane-dense).
    in_pad = _round_up(in_f, 128)
    out_pad = _round_up(out_f, 128)

    x_p = jnp.zeros((n_red_pad, in_pad), in_dt).at[:n, :in_f].set(x.astype(in_dt))
    w_p = jnp.zeros((in_pad, out_pad), in_dt).at[:in_f, :out_f].set(
        weight.astype(in_dt))
    adj_p = jnp.zeros((n_row_pad, n_red_pad), in_dt).at[:n, :n].set(
        adj.astype(in_dt))

    zero_bias = jnp.zeros((1, out_pad), jnp.float32)
    if bias is not None:
        b_p = zero_bias.at[0, :out_f].set(bias.astype(jnp.float32))
    else:
        b_p = zero_bias

    # ---- Stage 1: S = X @ W (cheap; single k step when in_pad <= 512). ----
    tm1 = _pick_tile(n_red_pad, (256, 128))
    tk1 = in_pad if in_pad <= 512 else _pick_tile(in_pad)
    tn1 = out_pad if out_pad <= 512 else _pick_tile(out_pad)
    s_p = _gcn_matmul(x_p, w_p, zero_bias, tm=tm1, tn=tn1, tk=tk1,
                      out_dtype=in_dt, allow_resident_b=True)

    # ---- Stage 2: out = adj @ S + bias (the dominant matmul). ----
    tn2 = out_pad if out_pad <= 512 else _pick_tile(out_pad)
    out_p = _gcn_matmul(adj_p, s_p, b_p, tm=tm, tn=tn2, tk=tk,
                        out_dtype=out_dtype, allow_resident_b=resident_s)

    return out_p[:n, :out_f]


if __name__ == "__main__":
    # Accurate f32 references (the default TPU matmul precision can be loose).
    jax.config.update("jax_default_matmul_precision", "highest")

    key = jax.random.PRNGKey(0)
    k_x, k_adj, k_w, k_b, k2 = jax.random.split(key, 5)

    # --- Test 1: tiny shapes matching the module, exact f32 path. -----------
    N, IN_F, OUT_F = 8, 32, 32
    x = jax.random.normal(k_x, (N, IN_F), dtype=jnp.float32)
    adj_raw = jax.random.uniform(k_adj, (N, N), dtype=jnp.float32)
    adj = adj_raw / jnp.sum(adj_raw, axis=-1, keepdims=True)

    # reset_parameters(): stdv = 1/sqrt(out_features); uniform(-stdv, stdv)
    stdv = 1.0 / math.sqrt(OUT_F)
    weight = jax.random.uniform(k_w, (IN_F, OUT_F), minval=-stdv, maxval=stdv,
                                dtype=jnp.float32)
    bias = jax.random.uniform(k_b, (OUT_F,), minval=-stdv, maxval=stdv,
                              dtype=jnp.float32)

    out = jax.block_until_ready(
        graph_convolution(x, adj, weight, bias, compute_dtype=jnp.float32))
    ref = adj @ (x @ weight) + bias
    assert out.shape == (N, OUT_F)
    assert jnp.allclose(out, ref, atol=1e-4, rtol=1e-4), "mismatch (small f32)"

    # --- Test 2: multi-tile grid, resident-S, default bf16 compute. ---------
    k_x2, k_adj2, k_w2, k_b2 = jax.random.split(k2, 4)
    N2, IN2, OUT2 = 640, 96, 192
    x2 = jax.random.normal(k_x2, (N2, IN2), dtype=jnp.float32)
    adj2_raw = jax.random.uniform(k_adj2, (N2, N2), dtype=jnp.float32)
    adj2 = adj2_raw / jnp.sum(adj2_raw, axis=-1, keepdims=True)
    stdv2 = 1.0 / math.sqrt(OUT2)
    w2 = jax.random.uniform(k_w2, (IN2, OUT2), minval=-stdv2, maxval=stdv2,
                            dtype=jnp.float32)
    b2 = jax.random.uniform(k_b2, (OUT2,), minval=-stdv2, maxval=stdv2,
                            dtype=jnp.float32)

    out2 = jax.block_until_ready(graph_convolution(x2, adj2, w2, bias=None))
    ref2 = adj2 @ (x2 @ w2)
    assert out2.shape == (N2, OUT2)
    # bf16 inputs (f32 accumulation): expect ~1e-3-level relative error.
    assert jnp.max(jnp.abs(out2 - ref2)) < 5e-3, "mismatch (bf16 resident-S)"

    # --- Test 3: tiled-S fallback path, multi-k accumulation, exact f32. ----
    out3 = jax.block_until_ready(
        graph_convolution(x2, adj2, w2, b2, compute_dtype=jnp.float32,
                          tm=256, tk=256, resident_s=False))
    ref3 = adj2 @ (x2 @ w2) + b2
    assert out3.shape == (N2, OUT2)
    assert jnp.allclose(out3, ref3, atol=1e-4, rtol=1e-4), "mismatch (tiled f32)"

    print("KERNEL_OK")
</pallas_src>

<mosaic_0001>
module attributes {stable_mosaic.version = 11 : i64} {
  func.func @_gemm_bias_resident_b_kernel(%arg0: i32, %arg1: i32, %arg2: i32, %arg3: memref<256x128xf32, #tpu.memory_space<vmem>>, %arg4: memref<128x128xf32, #tpu.memory_space<vmem>>, %arg5: memref<1x128xf32, #tpu.memory_space<vmem>>, %arg6: memref<256x128xf32, #tpu.memory_space<vmem>>, %arg7: memref<256x128xf32, #tpu.memory_space<vmem>>) attributes {dimension_semantics = [#tpu.dimension_semantics<parallel>, #tpu.dimension_semantics<parallel>, #tpu.dimension_semantics<arbitrary>], iteration_bounds = array<i64: 2, 1, 1>, scalar_prefetch = 0 : i64, scratch_operands = 1 : i64, tpu.core_type = #tpu.core_type<tc>, window_params = [{transform_indices = @transform_0, window_bounds = array<i64: 256, 128>}, {transform_indices = @transform_1, window_bounds = array<i64: 128, 128>}, {transform_indices = @transform_2, window_bounds = array<i64: 1, 128>}, {transform_indices = @transform_3, window_bounds = array<i64: 256, 128>}]} {
    %c0_i32 = arith.constant 0 : i32
    %0 = arith.cmpi eq, %arg2, %c0_i32 : i32
    %1 = arith.extui %0 : i1 to i32
    %c0_i32_0 = arith.constant 0 : i32
    %2 = arith.cmpi ne, %1, %c0_i32_0 : i32
    scf.if %2 {
      %cst_9 = arith.constant 0.000000e+00 : f32
      %15 = vector.broadcast %cst_9 : f32 to vector<256x128xf32>
      %c0_10 = arith.constant 0 : index
      %c0_11 = arith.constant 0 : index
      %16 = vector.load %arg7[%c0_10, %c0_11] : memref<256x128xf32, #tpu.memory_space<vmem>>, vector<256x128xf32>
      tpu.vector_store %arg7[%c0_10, %c0_11], %15 {strides = array<i32>} : memref<256x128xf32, #tpu.memory_space<vmem>>, vector<256x128xf32>,
    } else {
    }
    %c128_i32 = arith.constant 128 : i32
    %3 = arith.muli %arg2, %c128_i32 : i32
    %4 = tpu.assume_multiple %3, 128 : i32
    %c0 = arith.constant 0 : index
    %c0_1 = arith.constant 0 : index
    %5 = vector.load %arg7[%c0, %c0_1] : memref<256x128xf32, #tpu.memory_space<vmem>>, vector<256x128xf32>
    %c0_2 = arith.constant 0 : index
    %c0_3 = arith.constant 0 : index
    %6 = vector.load %arg3[%c0_2, %c0_3] : memref<256x128xf32, #tpu.memory_space<vmem>>, vector<256x128xf32>
    %7 = arith.index_cast %4 : i32 to index
    %c0_4 = arith.constant 0 : index
    %8 = vector.load %arg4[%7, %c0_4] : memref<128x128xf32, #tpu.memory_space<vmem>>, vector<128x128xf32>
    %cst = arith.constant dense<0.000000e+00> : vector<256x128xf32>
    %9 = tpu.matmul %6, %8, %cst {dimension_numbers = #tpu.dot_dimension_numbers<[1], [0], [0], [1], [0, 0, 1, 1], [], []>, precision = #tpu.contract_precision<fp32>} : vector<256x128xf32>, vector<128x128xf32>, vector<256x128xf32> -> vector<256x128xf32>
    %10 = arith.addf %5, %9 : vector<256x128xf32>
    %c0_5 = arith.constant 0 : index
    %c0_6 = arith.constant 0 : index
    %11 = vector.load %arg7[%c0_5, %c0_6] : memref<256x128xf32, #tpu.memory_space<vmem>>, vector<256x128xf32>
    tpu.vector_store %arg7[%c0_5, %c0_6], %10 {strides = array<i32>} : memref<256x128xf32, #tpu.memory_space<vmem>>, vector<256x128xf32>,
    %c0_i32_7 = arith.constant 0 : i32
    %12 = arith.cmpi eq, %arg2, %c0_i32_7 : i32
    %13 = arith.extui %12 : i1 to i32
    %c0_i32_8 = arith.constant 0 : i32
    %14 = arith.cmpi ne, %13, %c0_i32_8 : i32
    scf.if %14 {
      %c0_9 = arith.constant 0 : index
      %c0_10 = arith.constant 0 : index
      %15 = vector.load %arg7[%c0_9, %c0_10] : memref<256x128xf32, #tpu.memory_space<vmem>>, vector<256x128xf32>
      %c0_11 = arith.constant 0 : index
      %c0_12 = arith.constant 0 : index
      %16 = vector.load %arg5[%c0_11, %c0_12] : memref<1x128xf32, #tpu.memory_space<vmem>>, vector<1x128xf32>
      %17 = vector.broadcast %16 : vector<1x128xf32> to vector<256x128xf32>
      %18 = arith.addf %15, %17 : vector<256x128xf32>
      %c0_13 = arith.constant 0 : index
      %c0_14 = arith.constant 0 : index
      %19 = vector.load %arg6[%c0_13, %c0_14] : memref<256x128xf32, #tpu.memory_space<vmem>>, vector<256x128xf32>
      tpu.vector_store %arg6[%c0_13, %c0_14], %18 {strides = array<i32>} : memref<256x128xf32, #tpu.memory_space<vmem>>, vector<256x128xf32>,
    } else {
    }
    return
  }
  func.func @transform_0(%arg0: i32, %arg1: i32, %arg2: i32) -> (i32, i32) {
    %c0_i32 = arith.constant 0 : i32
    return %arg0, %arg2 : i32, i32
  }
  func.func @transform_1(%arg0: i32, %arg1: i32, %arg2: i32) -> (i32, i32) {
    %c0_i32 = arith.constant 0 : i32
    %c0_i32_0 = arith.constant 0 : i32
    return %c0_i32, %arg1 : i32, i32
  }
  func.func @transform_2(%arg0: i32, %arg1: i32, %arg2: i32) -> (i32, i32) {
    %c0_i32 = arith.constant 0 : i32
    %c0_i32_0 = arith.constant 0 : i32
    return %c0_i32, %arg1 : i32, i32
  }
  func.func @transform_3(%arg0: i32, %arg1: i32, %arg2: i32) -> (i32, i32) {
    %c0_i32 = arith.constant 0 : i32
    return %arg0, %arg1 : i32, i32
  }
}

</mosaic_0001>

<llo_original>
// kernel: tpu_custom_call.1
$region0: #{tpu_custom_call.1}
  #allocation0 [shape = 'u32[]', space=smem, size = 0x4, offset = 0x4, fixed_abs, tag = 'smem constant byte address 0x4 - core index']
  #allocation1 [shape = 'u32[144,128]{1,0:T(1,128)}', space=vmem, size = 0x12000, scoped, tag = 'internal scratch']
  #allocation2 [shape = 'f32[256,128]{1,0:T(8,128)}', space=vmem, size = 0x20000, scoped, tag = 'scratch operand']
  %s0 = inlined_call_operand.hbm [shape: f32[512,128], index: 0, kind: input, shape index: {}]
  %s1 = inlined_call_operand.hbm [shape: f32[128,128], index: 1, kind: input, shape index: {}]
  %s2 = inlined_call_operand.vmem [shape: f32[1,128], index: 2, kind: input, shape index: {}]
  %s3 = inlined_call_operand.hbm [shape: f32[512,128], index: 3, kind: output, shape index: {}]
  %s4 = sld [smem:[#allocation0]]
  $region61: #{tpu_custom_call.1} parent=0
    _
  %s6 = ssub.s32 1, %s4
  %s7 = scalar_select 0, %s6, %s4
  $region1: #{tpu_custom_call.1} parent=0
    #allocation3 [shape = 'u8[262144]{0}', space=vmem, size = 0x40000, scoped, tag = 'input window, operand 0']
    #allocation4 [shape = 's32[2]{0}', space=sflag, size = 0x8, scoped, tag = 'scoped memory for tpu_custom_call.1']
    #allocation5 [shape = 's32[2]{0}', space=sflag, size = 0x8, scoped, tag = 'scoped memory for tpu_custom_call.1']
    #allocation6 [shape = 'u8[65536]{0}', space=vmem, size = 0x10000, scoped, tag = 'input window, operand 1, single buffered']
    #allocation7 [shape = 's32[1]{0}', space=sflag, size = 0x4, scoped, tag = 'scoped memory for tpu_custom_call.1']
    #allocation8 [shape = 'u8[262144]{0}', space=vmem, size = 0x40000, scoped, tag = 'output window, operand 0']
    %8 = vsyncpa [#allocation4], 0
    %s9 = scalar_lea.sflag [#allocation4], 1
    %10 = vsyncpa %s9, 0
    %11 = vsyncpa [#allocation7], 0
    %12 = vsyncpa [#allocation5], 0
    %s13 = scalar_lea.sflag [#allocation5], 1
    %14 = vsyncpa %s13, 0
    loop: start=0, step=1, limit=4
    $region2: #{tpu_custom_call.1} parent=1 // loop_pre_header
      _
    $region3: #{tpu_custom_call.1} parent=1 // loop_header
      %s16 = sphi 0, %s20
      %p17 = scmp.ge.s32.totalorder %s16, 4
      %s23 = sphi 0, %s42
      %s24 = sphi 0, %s38
      %s25 = sphi 0, %s34
      %s26 = sphi 0, %s23
      %s27 = sphi 0, %s24
      %s28 = sphi 0, %s25
      %s29 = sphi 0, %s26
      %s30 = sphi 0, %s27
      %s31 = sphi 0, %s28
      %s47 = sphi 0, %s49
      %s50 = sphi 0, %s47
      %s51 = sphi 0, %s50
      %s67 = sphi 0, %s51
      %s73 = sphi 0, %s75
      %s76 = sphi 0, %s73
      %s77 = sphi 0, %s76
      %s93 = sphi 0, %s77
      %s99 = sphi 0, %s101
      %s102 = sphi 0, %s99
      %s103 = sphi 0, %s102
      %s119 = sphi 0, %s103
      %s127 = sphi 0, %s129
      %s130 = sphi 0, %s127
      %s131 = sphi 0, %s130
      %s147 = sphi 0, %s131
    $region4: #{tpu_custom_call.1} parent=1 // loop_header_branch
      %19 = sbr.rel (%p17) target = $region8
    $region5: #{tpu_custom_call.1} parent=1 // loop_body
      %s21 = ssub.s32 %s16, 1
      %s22 = ssub.s32 %s16, 2
      %s32 = sadd.s32 1, %s25
      %p33 = scmp.ge.s32.totalorder %s32, 1
      %s34 = scalar_select %p33, 0, %s32
      %s35 = sadd.s32 1, %s24
      %s36 = scalar_select %p33, %s35, %s24
      %p37 = scmp.ge.s32.totalorder %s36, 1
      %s38 = scalar_select %p37, 0, %s36
      %s39 = sadd.s32 1, %s23
      %s40 = scalar_select %p37, %s39, %s23
      %p41 = scmp.ge.s32.totalorder %s40, 2
      %s42 = scalar_select %p41, 0, %s40
      %s43 = ssub.s32 %s23, %s42
      %s44 = ssub.s32 %s25, %s34
      %s45 = sor.u32 %s43, %s44
      %p46 = scmp.eq.s32.totalorder %s45, 0
      %s48 = sadd.s32 %s47, 1
      %s49 = scalar_select %p46, %s47, %s48
      %p52 = pneg %p46
      %p53 = scmp.eq.s32.totalorder %s16, 1
      %p54 = por %p52, %p53
      %p55 = scmp.ne.s32.totalorder %s47, %s50
      %p56 = scmp.eq.s32.totalorder %s16, 0
      %p57 = por %p55, %p56
      %p58 = scmp.ne.s32.totalorder %s47, %s50
      %p59 = scmp.eq.s32.totalorder %s21, 1
      %p60 = por %p58, %p59
      %p61 = scmp.ne.s32.totalorder %s50, %s51
      %p62 = scmp.eq.s32.totalorder %s21, 0
      %p63 = por %p61, %p62
      %p64 = scmp.ne.s32.totalorder %s50, %s51
      %p65 = scmp.eq.s32.totalorder %s22, 1
      %p66 = por %p64, %p65
      %p68 = scmp.ne.s32.totalorder %s51, %s67
      %p69 = scmp.eq.s32.totalorder %s22, 0
      %p70 = por %p68, %p69
      %s71 = ssub.s32 %s24, %s38
      %p72 = scmp.eq.s32.totalorder %s71, 0
      %s74 = sadd.s32 %s73, 1
      %s75 = scalar_select %p72, %s73, %s74
      %p78 = pneg %p72
      %p79 = scmp.eq.s32.totalorder %s16, 1
      %p80 = por %p78, %p79
      %p81 = scmp.ne.s32.totalorder %s73, %s76
      %p82 = scmp.eq.s32.totalorder %s16, 0
      %p83 = por %p81, %p82
      %p84 = scmp.ne.s32.totalorder %s73, %s76
      %p85 = scmp.eq.s32.totalorder %s21, 1
      %p86 = por %p84, %p85
      %p87 = scmp.ne.s32.totalorder %s76, %s77
      %p88 = scmp.eq.s32.totalorder %s21, 0
      %p89 = por %p87, %p88
      %p90 = scmp.ne.s32.totalorder %s76, %s77
      %p91 = scmp.eq.s32.totalorder %s22, 1
      %p92 = por %p90, %p91
      %p94 = scmp.ne.s32.totalorder %s77, %s93
      %p95 = scmp.eq.s32.totalorder %s22, 0
      %p96 = por %p94, %p95
      %s97 = ssub.s32 %s24, %s38
      %p98 = scmp.eq.s32.totalorder %s97, 0
      %s100 = sadd.s32 %s99, 1
      %s101 = scalar_select %p98, %s99, %s100
      %p104 = pneg %p98
      %p105 = scmp.eq.s32.totalorder %s16, 1
      %p106 = por %p104, %p105
      %p107 = scmp.ne.s32.totalorder %s99, %s102
      %p108 = scmp.eq.s32.totalorder %s16, 0
      %p109 = por %p107, %p108
      %p110 = scmp.ne.s32.totalorder %s99, %s102
      %p111 = scmp.eq.s32.totalorder %s21, 1
      %p112 = por %p110, %p111
      %p113 = scmp.ne.s32.totalorder %s102, %s103
      %p114 = scmp.eq.s32.totalorder %s21, 0
      %p115 = por %p113, %p114
      %p116 = scmp.ne.s32.totalorder %s102, %s103
      %p117 = scmp.eq.s32.totalorder %s22, 1
      %p118 = por %p116, %p117
      %p120 = scmp.ne.s32.totalorder %s103, %s119
      %p121 = scmp.eq.s32.totalorder %s22, 0
      %p122 = por %p120, %p121
      %s123 = ssub.s32 %s23, %s42
      %s124 = ssub.s32 %s24, %s38
      %s125 = sor.u32 %s123, %s124
      %p126 = scmp.eq.s32.totalorder %s125, 0
      %s128 = sadd.s32 %s127, 1
      %s129 = scalar_select %p126, %s127, %s128
      %p132 = pneg %p126
      %p133 = scmp.eq.s32.totalorder %s16, 1
      %p134 = por %p132, %p133
      %p135 = scmp.ne.s32.totalorder %s127, %s130
      %p136 = scmp.eq.s32.totalorder %s16, 0
      %p137 = por %p135, %p136
      %p138 = scmp.ne.s32.totalorder %s127, %s130
      %p139 = scmp.eq.s32.totalorder %s21, 1
      %p140 = por %p138, %p139
      %p141 = scmp.ne.s32.totalorder %s130, %s131
      %p142 = scmp.eq.s32.totalorder %s21, 0
      %p143 = por %p141, %p142
      %p144 = scmp.ne.s32.totalorder %s130, %s131
      %p145 = scmp.eq.s32.totalorder %s22, 1
      %p146 = por %p144, %p145
      %p148 = scmp.ne.s32.totalorder %s131, %s147
      %p149 = scmp.eq.s32.totalorder %s22, 0
      %p150 = por %p148, %p149
      %p151 = scmp.le.s32.totalorder 1, %s16
      %p152 = scmp.lt.s32.totalorder %s16, 3
      %p153 = pnand %p151, %p152
      %p154 = pneg %p153
      // Predicated region
      $region9: #{tpu_custom_call.1} parent=5 // pred_check
        _
      $region10: #{tpu_custom_call.1} parent=5 // pred_check_branch
        %156 = sbr.rel (%p153) target = $region12
      $region11: #{tpu_custom_call.1} parent=5 // pred_region
        %s157 = ssub.s32 %s16, 1
        // Predicated region
        $region13: #{tpu_custom_call.1} parent=11 // pred_check
          %p158 = pneg %p89
        $region14: #{tpu_custom_call.1} parent=11 // pred_check_branch
          %160 = sbr.rel (%p158) target = $region16
        $region15: #{tpu_custom_call.1} parent=11 // pred_region
          %s162 = ssub.s32 2048, 2048
          %163 = vsyncadd [#allocation7], %s162
          %s164 = smul.addr %s27, 128
          %s165 = scalar_lea.hbm %s1, %s164
          %s166 = sshll.u32 [#allocation6], 4
          %s167 = int_to_ptr.vmem [resolvable:$true] %s166
          %172 = dma.hbm_to_vmem [thread:$0]  %s165, 2048, %s167, [#allocation7], 128, 128, 8
        $region16: #{tpu_custom_call.1} parent=11 // pred_fallthru
          _
        // Predicated region
        $region17: #{tpu_custom_call.1} parent=11 // pred_check
          %p173 = pneg %p115
        $region18: #{tpu_custom_call.1} parent=11 // pred_check_branch
          %175 = sbr.rel (%p173) target = $region20
        $region19: #{tpu_custom_call.1} parent=11 // pred_region
          %p176 = scmp.lt.s32.totalorder %s27, 0
          %s177 = scalar_select %p176, %s27, 0
          %s178 = scalar_lea.vmem %s2, %s177
        $region20: #{tpu_custom_call.1} parent=11 // pred_fallthru
          _
      $region12: #{tpu_custom_call.1} parent=5 // pred_fallthru
        _
      %p179 = scmp.lt.s32.totalorder %s16, 2
      // Predicated region
      $region21: #{tpu_custom_call.1} parent=5 // pred_check
        %p180 = pneg %p179
      $region22: #{tpu_custom_call.1} parent=5 // pred_check_branch
        %182 = sbr.rel (%p180) target = $region24
      $region23: #{tpu_custom_call.1} parent=5 // pred_region
        // Predicated region
        $region25: #{tpu_custom_call.1} parent=23 // pred_check
          %p183 = pneg %p57
        $region26: #{tpu_custom_call.1} parent=23 // pred_check_branch
          %185 = sbr.rel (%p183) target = $region28
        $region27: #{tpu_custom_call.1} parent=23 // pred_region
          %s186 = sand.u32 %s47, 1
          %s187 = scalar_lea.sflag [#allocation4], %s186
          %s188 = sand.u32 %s47, 1
          %s189 = smul.addr %s188, 256
          %s190 = scalar_lea.vmem [#allocation3], %s189
          %s191 = smul.u32 32, %s23
          %s193 = ssub.s32 4096, 4096
          %194 = vsyncadd %s187, %s193
          %s195 = sadd.s32 %s25, %s191
          %s196 = smul.addr %s195, 128
          %s197 = scalar_lea.hbm %s0, %s196
          %s198 = sshll.u32 %s190, 4
          %s199 = int_to_ptr.vmem [resolvable:$true] %s198
          %204 = dma.hbm_to_vmem [thread:$0]  %s197, 4096, %s199, %s187, 128, 128, 8
        $region28: #{tpu_custom_call.1} parent=23 // pred_fallthru
          _
      $region24: #{tpu_custom_call.1} parent=5 // pred_fallthru
        _
      %p205 = scmp.le.s32.totalorder 1, %s16
      %p206 = scmp.lt.s32.totalorder %s16, 3
      %p207 = pnand %p205, %p206
      %p208 = pneg %p207
      // Predicated region
      $region29: #{tpu_custom_call.1} parent=5 // pred_check
        _
      $region30: #{tpu_custom_call.1} parent=5 // pred_check_branch
        %210 = sbr.rel (%p207) target = $region32
      $region31: #{tpu_custom_call.1} parent=5 // pred_region
        %s211 = ssub.s32 %s16, 1
        %s212 = sand.u32 %s50, 1
        %s213 = scalar_lea.sflag [#allocation4], %s212
        %s214 = sand.u32 %s50, 1
        %s215 = smul.addr %s214, 256
        %s216 = scalar_lea.vmem [#allocation3], %s215
        // Predicated region
        $region33: #{tpu_custom_call.1} parent=31 // pred_check
          %p217 = pneg %p63
        $region34: #{tpu_custom_call.1} parent=31 // pred_check_branch
          %219 = sbr.rel (%p217) target = $region36
        $region35: #{tpu_custom_call.1} parent=31 // pred_region
          %220 = dma.done %s213, 4096
        $region36: #{tpu_custom_call.1} parent=31 // pred_fallthru
          _
        // Predicated region
        $region37: #{tpu_custom_call.1} parent=31 // pred_check
          %p221 = pneg %p89
        $region38: #{tpu_custom_call.1} parent=31 // pred_check_branch
          %223 = sbr.rel (%p221) target = $region40
        $region39: #{tpu_custom_call.1} parent=31 // pred_region
          %224 = dma.done [#allocation7], 2048
        $region40: #{tpu_custom_call.1} parent=31 // pred_fallthru
          _
        %s225 = sand.u32 %s50, 1
        %s226 = scalar_lea.sflag [#allocation4], %s225
        %s227 = sand.u32 %s50, 1
        %s228 = smul.addr %s227, 256
        %s229 = scalar_lea.vmem [#allocation3], %s228
        %p230 = pneg %p63
        %p231 = pneg %p60
        %p232 = pneg %p89
        %p233 = pneg %p86
        %p234 = scmp.lt.s32.totalorder %s27, 0
        %s235 = scalar_select %p234, %s27, 0
        %s236 = scalar_lea.vmem %s2, %s235
        %p237 = pneg %p115
        %p238 = pneg %p112
        %p239 = pneg %p143
        %p240 = pneg %p140
        %s241 = sand.u32 %s130, 1
        %s242 = scalar_lea.sflag [#allocation5], %s241
        %s243 = sand.u32 %s130, 1
        %s244 = smul.addr %s243, 256
        %s245 = scalar_lea.vmem [#allocation8], %s244
        %s246 = smul.u32 32, %s26
        %p247 = scmp.lt.s32.totalorder %s27, 0
        %s248 = scalar_select %p247, %s27, 0
        %s249 = scalar_lea.vmem %s2, %s248
        %s250 = smul.u32 32, %s26
        %p251 = scmp.eq.s32.totalorder %s28, 0
        // Predicated region
        $region41: #{tpu_custom_call.1} parent=31 // pred_check
          %p252 = pneg %p251
        $region42: #{tpu_custom_call.1} parent=31 // pred_check_branch
          %254 = sbr.rel (%p252) target = $region44
        $region43: #{tpu_custom_call.1} parent=31 // pred_region
          %255 = vst [vmem:[#allocation2] sm:$0xff] 0.0
          %256 = vst [vmem:[#allocation2 + $0x8] sm:$0xff] 0.0
          %257 = vst [vmem:[#allocation2 + $0x10] sm:$0xff] 0.0
          %258 = vst [vmem:[#allocation2 + $0x18] sm:$0xff] 0.0
          %259 = vst [vmem:[#allocation2 + $0x20] sm:$0xff] 0.0
          %260 = vst [vmem:[#allocation2 + $0x28] sm:$0xff] 0.0
          %261 = vst [vmem:[#allocation2 + $0x30] sm:$0xff] 0.0
          %262 = vst [vmem:[#allocation2 + $0x38] sm:$0xff] 0.0
          %263 = vst [vmem:[#allocation2 + $0x40] sm:$0xff] 0.0
          %264 = vst [vmem:[#allocation2 + $0x48] sm:$0xff] 0.0
          %265 = vst [vmem:[#allocation2 + $0x50] sm:$0xff] 0.0
          %266 = vst [vmem:[#allocation2 + $0x58] sm:$0xff] 0.0
          %267 = vst [vmem:[#allocation2 + $0x60] sm:$0xff] 0.0
          %268 = vst [vmem:[#allocation2 + $0x68] sm:$0xff] 0.0
          %269 = vst [vmem:[#allocation2 + $0x70] sm:$0xff] 0.0
          %270 = vst [vmem:[#allocation2 + $0x78] sm:$0xff] 0.0
          %271 = vst [vmem:[#allocation2 + $0x80] sm:$0xff] 0.0
          %272 = vst [vmem:[#allocation2 + $0x88] sm:$0xff] 0.0
          %273 = vst [vmem:[#allocation2 + $0x90] sm:$0xff] 0.0
          %274 = vst [vmem:[#allocation2 + $0x98] sm:$0xff] 0.0
          %275 = vst [vmem:[#allocation2 + $0xa0] sm:$0xff] 0.0
          %276 = vst [vmem:[#allocation2 + $0xa8] sm:$0xff] 0.0
          %277 = vst [vmem:[#allocation2 + $0xb0] sm:$0xff] 0.0
          %278 = vst [vmem:[#allocation2 + $0xb8] sm:$0xff] 0.0
          %279 = vst [vmem:[#allocation2 + $0xc0] sm:$0xff] 0.0
          %280 = vst [vmem:[#allocation2 + $0xc8] sm:$0xff] 0.0
          %281 = vst [vmem:[#allocation2 + $0xd0] sm:$0xff] 0.0
          %282 = vst [vmem:[#allocation2 + $0xd8] sm:$0xff] 0.0
          %283 = vst [vmem:[#allocation2 + $0xe0] sm:$0xff] 0.0
          %284 = vst [vmem:[#allocation2 + $0xe8] sm:$0xff] 0.0
          %285 = vst [vmem:[#allocation2 + $0xf0] sm:$0xff] 0.0
          %286 = vst [vmem:[#allocation2 + $0xf8] sm:$0xff] 0.0
        $region44: #{tpu_custom_call.1} parent=31 // pred_fallthru
          _
        %s287 = smul.u32 %s28, 128
        %v288 = vld [vmem:[#allocation2] sm:$0xff]
        %v289 = vld [vmem:[#allocation2 + $0x8] sm:$0xff]
        %v290 = vld [vmem:[#allocation2 + $0x10] sm:$0xff]
        %v291 = vld [vmem:[#allocation2 + $0x18] sm:$0xff]
        %v292 = vld [vmem:[#allocation2 + $0x20] sm:$0xff]
        %v293 = vld [vmem:[#allocation2 + $0x28] sm:$0xff]
        %v294 = vld [vmem:[#allocation2 + $0x30] sm:$0xff]
        %v295 = vld [vmem:[#allocation2 + $0x38] sm:$0xff]
        %v296 = vld [vmem:[#allocation2 + $0x40] sm:$0xff]
        %v297 = vld [vmem:[#allocation2 + $0x48] sm:$0xff]
        %v298 = vld [vmem:[#allocation2 + $0x50] sm:$0xff]
        %v299 = vld [vmem:[#allocation2 + $0x58] sm:$0xff]
        %v300 = vld [vmem:[#allocation2 + $0x60] sm:$0xff]
        %v301 = vld [vmem:[#allocation2 + $0x68] sm:$0xff]
        %v302 = vld [vmem:[#allocation2 + $0x70] sm:$0xff]
        %v303 = vld [vmem:[#allocation2 + $0x78] sm:$0xff]
        %v304 = vld [vmem:[#allocation2 + $0x80] sm:$0xff]
        %v305 = vld [vmem:[#allocation2 + $0x88] sm:$0xff]
        %v306 = vld [vmem:[#allocation2 + $0x90] sm:$0xff]
        %v307 = vld [vmem:[#allocation2 + $0x98] sm:$0xff]
        %v308 = vld [vmem:[#allocation2 + $0xa0] sm:$0xff]
        %v309 = vld [vmem:[#allocation2 + $0xa8] sm:$0xff]
        %v310 = vld [vmem:[#allocation2 + $0xb0] sm:$0xff]
        %v311 = vld [vmem:[#allocation2 + $0xb8] sm:$0xff]
        %v312 = vld [vmem:[#allocation2 + $0xc0] sm:$0xff]
        %v313 = vld [vmem:[#allocation2 + $0xc8] sm:$0xff]
        %v314 = vld [vmem:[#allocation2 + $0xd0] sm:$0xff]
        %v315 = vld [vmem:[#allocation2 + $0xd8] sm:$0xff]
        %v316 = vld [vmem:[#allocation2 + $0xe0] sm:$0xff]
        %v317 = vld [vmem:[#allocation2 + $0xe8] sm:$0xff]
        %v318 = vld [vmem:[#allocation2 + $0xf0] sm:$0xff]
        %v319 = vld [vmem:[#allocation2 + $0xf8] sm:$0xff]
        %v320 = vld [vmem:[%s216] sm:$0xff]
        %v321 = vld [vmem:[%s216 + $0x8] sm:$0xff]
        %v322 = vld [vmem:[%s216 + $0x10] sm:$0xff]
        %v323 = vld [vmem:[%s216 + $0x18] sm:$0xff]
        %v324 = vld [vmem:[%s216 + $0x20] sm:$0xff]
        %v325 = vld [vmem:[%s216 + $0x28] sm:$0xff]
        %v326 = vld [vmem:[%s216 + $0x30] sm:$0xff]
        %v327 = vld [vmem:[%s216 + $0x38] sm:$0xff]
        %v328 = vld [vmem:[%s216 + $0x40] sm:$0xff]
        %v329 = vld [vmem:[%s216 + $0x48] sm:$0xff]
        %v330 = vld [vmem:[%s216 + $0x50] sm:$0xff]
        %v331 = vld [vmem:[%s216 + $0x58] sm:$0xff]
        %v332 = vld [vmem:[%s216 + $0x60] sm:$0xff]
        %v333 = vld [vmem:[%s216 + $0x68] sm:$0xff]
        %v334 = vld [vmem:[%s216 + $0x70] sm:$0xff]
        %v335 = vld [vmem:[%s216 + $0x78] sm:$0xff]
        %v336 = vld [vmem:[%s216 + $0x80] sm:$0xff]
        %v337 = vld [vmem:[%s216 + $0x88] sm:$0xff]
        %v338 = vld [vmem:[%s216 + $0x90] sm:$0xff]
        %v339 = vld [vmem:[%s216 + $0x98] sm:$0xff]
        %v340 = vld [vmem:[%s216 + $0xa0] sm:$0xff]
        %v341 = vld [vmem:[%s216 + $0xa8] sm:$0xff]
        %v342 = vld [vmem:[%s216 + $0xb0] sm:$0xff]
        %v343 = vld [vmem:[%s216 + $0xb8] sm:$0xff]
        %v344 = vld [vmem:[%s216 + $0xc0] sm:$0xff]
        %v345 = vld [vmem:[%s216 + $0xc8] sm:$0xff]
        %v346 = vld [vmem:[%s216 + $0xd0] sm:$0xff]
        %v347 = vld [vmem:[%s216 + $0xd8] sm:$0xff]
        %v348 = vld [vmem:[%s216 + $0xe0] sm:$0xff]
        %v349 = vld [vmem:[%s216 + $0xe8] sm:$0xff]
        %v350 = vld [vmem:[%s216 + $0xf0] sm:$0xff]
        %v351 = vld [vmem:[%s216 + $0xf8] sm:$0xff]
        %s352 = scalar_lea.vmem [#allocation6], %s287
        %v353 = vld [vmem:[%s352] sm:$0xff]
        %v354 = vld [vmem:[%s352 + $0x8] sm:$0xff]
        %v355 = vld [vmem:[%s352 + $0x10] sm:$0xff]
        %v356 = vld [vmem:[%s352 + $0x18] sm:$0xff]
        %v357 = vld [vmem:[%s352 + $0x20] sm:$0xff]
        %v358 = vld [vmem:[%s352 + $0x28] sm:$0xff]
        %v359 = vld [vmem:[%s352 + $0x30] sm:$0xff]
        %v360 = vld [vmem:[%s352 + $0x38] sm:$0xff]
        %v361 = vld [vmem:[%s352 + $0x40] sm:$0xff]
        %v362 = vld [vmem:[%s352 + $0x48] sm:$0xff]
        %v363 = vld [vmem:[%s352 + $0x50] sm:$0xff]
        %v364 = vld [vmem:[%s352 + $0x58] sm:$0xff]
        %v365 = vld [vmem:[%s352 + $0x60] sm:$0xff]
        %v366 = vld [vmem:[%s352 + $0x68] sm:$0xff]
        %v367 = vld [vmem:[%s352 + $0x70] sm:$0xff]
        %v368 = vld [vmem:[%s352 + $0x78] sm:$0xff]
        %369 = vmatprep.subr.mxu0 0.0
        %v370 = vand.u32 %v353, 4294901760
        %371 = vmatpush1.msra.mxu0 %v370
        %372 = vmatprep.subr.mxu0 0.0
        %v373 = vand.u32 %v354, 4294901760
        %374 = vmatpush1.msra.mxu0 %v373
        %375 = vmatprep.subr.mxu0 0.0
        %v376 = vand.u32 %v355, 4294901760
        %377 = vmatpush1.msra.mxu0 %v376
        %378 = vmatprep.subr.mxu0 0.0
        %v379 = vand.u32 %v356, 4294901760
        %380 = vmatpush1.msra.mxu0 %v379
        %381 = vmatprep.subr.mxu0 0.0
        %v382 = vand.u32 %v357, 4294901760
        %383 = vmatpush1.msra.mxu0 %v382
        %384 = vmatprep.subr.mxu0 0.0
        %v385 = vand.u32 %v358, 4294901760
        %386 = vmatpush1.msra.mxu0 %v385
        %387 = vmatprep.subr.mxu0 0.0
        %v388 = vand.u32 %v359, 4294901760
        %389 = vmatpush1.msra.mxu0 %v388
        %390 = vmatprep.subr.mxu0 0.0
        %v391 = vand.u32 %v360, 4294901760
        %392 = vmatpush1.msra.mxu0 %v391
        %393 = vmatprep.subr.mxu0 0.0
        %v394 = vand.u32 %v361, 4294901760
        %395 = vmatpush1.msra.mxu0 %v394
        %396 = vmatprep.subr.mxu0 0.0
        %v397 = vand.u32 %v362, 4294901760
        %398 = vmatpush1.msra.mxu0 %v397
        %399 = vmatprep.subr.mxu0 0.0
        %v400 = vand.u32 %v363, 4294901760
        %401 = vmatpush1.msra.mxu0 %v400
        %402 = vmatprep.subr.mxu0 0.0
        %v403 = vand.u32 %v364, 4294901760
        %404 = vmatpush1.msra.mxu0 %v403
        %405 = vmatprep.subr.mxu0 0.0
        %v406 = vand.u32 %v365, 4294901760
        %407 = vmatpush1.msra.mxu0 %v406
        %408 = vmatprep.subr.mxu0 0.0
        %v409 = vand.u32 %v366, 4294901760
        %410 = vmatpush1.msra.mxu0 %v409
        %411 = vmatprep.subr.mxu0 0.0
        %v412 = vand.u32 %v367, 4294901760
        %413 = vmatpush1.msra.mxu0 %v412
        %414 = vmatprep.subr.mxu0 0.0
        %v415 = vand.u32 %v368, 4294901760
        %416 = vmatpush1.msra.mxu0 %v415
        %417 = vmatprep.subr.mxu0 0.0
        %418 = vmatpush1.msra.mxu0 0.0
        %419 = vmatprep.subr.mxu0 0.0
        %420 = vmatpush1.msra.mxu0 0.0
        %421 = vmatprep.subr.mxu0 0.0
        %422 = vmatpush1.msra.mxu0 0.0
        %423 = vmatprep.subr.mxu0 0.0
        %424 = vmatpush1.msra.mxu0 0.0
        %425 = vmatprep.subr.mxu0 0.0
        %426 = vmatpush1.msra.mxu0 0.0
        %427 = vmatprep.subr.mxu0 0.0
        %428 = vmatpush1.msra.mxu0 0.0
        %429 = vmatprep.subr.mxu0 0.0
        %430 = vmatpush1.msra.mxu0 0.0
        %431 = vmatprep.subr.mxu0 0.0
        %432 = vmatpush1.msra.mxu0 0.0
        %433 = vmatprep.subr.mxu0 0.0
        %434 = vmatpush1.msra.mxu0 0.0
        %435 = vmatprep.subr.mxu0 0.0
        %436 = vmatpush1.msra.mxu0 0.0
        %437 = vmatprep.subr.mxu0 0.0
        %438 = vmatpush1.msra.mxu0 0.0
        %439 = vmatprep.subr.mxu0 0.0
        %440 = vmatpush1.msra.mxu0 0.0
        %441 = vmatprep.subr.mxu0 0.0
        %442 = vmatpush1.msra.mxu0 0.0
        %443 = vmatprep.subr.mxu0 0.0
        %444 = vmatpush1.msra.mxu0 0.0
        %445 = vmatprep.subr.mxu0 0.0
        %446 = vmatpush1.msra.mxu0 0.0
        %447 = vmatprep.subr.mxu0 0.0
        %448 = vmatpush1.msra.mxu0 0.0
        %449 = vmatprep.mubr.f32.mxu0 0.0
        %v450 = vand.u32 %v320, 4294901760
        %v451 = vsub.f32 %v320, %v450
        %v452 = vand.u32 %v451, 4294901760
        %v453 = vsub.f32 %v451, %v452
        %v454 = vand.u32 %v453, 4294901760
        %455 = vmatmul.mubr.f32.gmra.mrb[0].mxu0 %v454
        %v456 = vpop.f32.mrb[0].mxu0
        %v457 = vadd.f32 0.0, %v456
        %v458 = vpop.f32.mrb[0].mxu0
        %459 = vmatprep.mubr.f32.mxu0 0.0
        %v460 = vand.u32 %v321, 4294901760
        %v461 = vsub.f32 %v321, %v460
        %v462 = vand.u32 %v461, 4294901760
        %v463 = vsub.f32 %v461, %v462
        %v464 = vand.u32 %v463, 4294901760
        %465 = vmatmul.mubr.f32.gmra.mrb[0].mxu0 %v464
        %v466 = vpop.f32.mrb[0].mxu0
        %v467 = vadd.f32 0.0, %v466
        %v468 = vpop.f32.mrb[0].mxu0
        %469 = vmatprep.mubr.f32.mxu0 0.0
        %v470 = vand.u32 %v322, 4294901760
        %v471 = vsub.f32 %v322, %v470
        %v472 = vand.u32 %v471, 4294901760
        %v473 = vsub.f32 %v471, %v472
        %v474 = vand.u32 %v473, 4294901760
        %475 = vmatmul.mubr.f32.gmra.mrb[0].mxu0 %v474
        %v476 = vpop.f32.mrb[0].mxu0
        %v477 = vadd.f32 0.0, %v476
        %v478 = vpop.f32.mrb[0].mxu0
        %479 = vmatprep.mubr.f32.mxu0 0.0
        %v480 = vand.u32 %v323, 4294901760
        %v481 = vsub.f32 %v323, %v480
        %v482 = vand.u32 %v481, 4294901760
        %v483 = vsub.f32 %v481, %v482
        %v484 = vand.u32 %v483, 4294901760
        %485 = vmatmul.mubr.f32.gmra.mrb[0].mxu0 %v484
        %v486 = vpop.f32.mrb[0].mxu0
        %v487 = vadd.f32 0.0, %v486
        %v488 = vpop.f32.mrb[0].mxu0
        %489 = vmatprep.mubr.f32.mxu0 0.0
        %v490 = vand.u32 %v324, 4294901760
        %v491 = vsub.f32 %v324, %v490
        %v492 = vand.u32 %v491, 4294901760
        %v493 = vsub.f32 %v491, %v492
        %v494 = vand.u32 %v493, 4294901760
        %495 = vmatmul.mubr.f32.gmra.mrb[0].mxu0 %v494
        %v496 = vpop.f32.mrb[0].mxu0
        %v497 = vadd.f32 0.0, %v496
        %v498 = vpop.f32.mrb[0].mxu0
        %499 = vmatprep.mubr.f32.mxu0 0.0
        %v500 = vand.u32 %v325, 4294901760
        %v501 = vsub.f32 %v325, %v500
        %v502 = vand.u32 %v501, 4294901760
        %v503 = vsub.f32 %v501, %v502
        %v504 = vand.u32 %v503, 4294901760
        %505 = vmatmul.mubr.f32.gmra.mrb[0].mxu0 %v504
        %v506 = vpop.f32.mrb[0].mxu0
        %v507 = vadd.f32 0.0, %v506
        %v508 = vpop.f32.mrb[0].mxu0
        %509 = vmatprep.mubr.f32.mxu0 0.0
        %v510 = vand.u32 %v326, 4294901760
        %v511 = vsub.f32 %v326, %v510
        %v512 = vand.u32 %v511, 4294901760
        %v513 = vsub.f32 %v511, %v512
        %v514 = vand.u32 %v513, 4294901760
        %515 = vmatmul.mubr.f32.gmra.mrb[0].mxu0 %v514
        %v516 = vpop.f32.mrb[0].mxu0
        %v517 = vadd.f32 0.0, %v516
        %v518 = vpop.f32.mrb[0].mxu0
        %519 = vmatprep.mubr.f32.mxu0 0.0
        %v520 = vand.u32 %v327, 4294901760
        %v521 = vsub.f32 %v327, %v520
        %v522 = vand.u32 %v521, 4294901760
        %v523 = vsub.f32 %v521, %v522
        %v524 = vand.u32 %v523, 4294901760
        %525 = vmatmul.mubr.f32.gmra.mrb[0].mxu0 %v524
        %v526 = vpop.f32.mrb[0].mxu0
        %v527 = vadd.f32 0.0, %v526
        %v528 = vpop.f32.mrb[0].mxu0
        %529 = vmatprep.mubr.f32.mxu0 0.0
        %v530 = vand.u32 %v328, 4294901760
        %v531 = vsub.f32 %v328, %v530
        %v532 = vand.u32 %v531, 4294901760
        %v533 = vsub.f32 %v531, %v532
        %v534 = vand.u32 %v533, 4294901760
        %535 = vmatmul.mubr.f32.gmra.mrb[0].mxu0 %v534
        %v536 = vpop.f32.mrb[0].mxu0
        %v537 = vadd.f32 0.0, %v536
        %v538 = vpop.f32.mrb[0].mxu0
        %539 = vmatprep.mubr.f32.mxu0 0.0
        %v540 = vand.u32 %v329, 4294901760
        %v541 = vsub.f32 %v329, %v540
        %v542 = vand.u32 %v541, 4294901760
        %v543 = vsub.f32 %v541, %v542
        %v544 = vand.u32 %v543, 4294901760
        %545 = vmatmul.mubr.f32.gmra.mrb[0].mxu0 %v544
        %v546 = vpop.f32.mrb[0].mxu0
        %v547 = vadd.f32 0.0, %v546
        %v548 = vpop.f32.mrb[0].mxu0
        %549 = vmatprep.mubr.f32.mxu0 0.0
        %v550 = vand.u32 %v330, 4294901760
        %v551 = vsub.f32 %v330, %v550
        %v552 = vand.u32 %v551, 4294901760
        %v553 = vsub.f32 %v551, %v552
        %v554 = vand.u32 %v553, 4294901760
        %555 = vmatmul.mubr.f32.gmra.mrb[0].mxu0 %v554
        %v556 = vpop.f32.mrb[0].mxu0
        %v557 = vadd.f32 0.0, %v556
        %v558 = vpop.f32.mrb[0].mxu0
        %559 = vmatprep.mubr.f32.mxu0 0.0
        %v560 = vand.u32 %v331, 4294901760
        %v561 = vsub.f32 %v331, %v560
        %v562 = vand.u32 %v561, 4294901760
        %v563 = vsub.f32 %v561, %v562
        %v564 = vand.u32 %v563, 4294901760
        %565 = vmatmul.mubr.f32.gmra.mrb[0].mxu0 %v564
        %v566 = vpop.f32.mrb[0].mxu0
        %v567 = vadd.f32 0.0, %v566
        %v568 = vpop.f32.mrb[0].mxu0
        %569 = vmatprep.mubr.f32.mxu0 0.0
        %v570 = vand.u32 %v332, 4294901760
        %v571 = vsub.f32 %v332, %v570
        %v572 = vand.u32 %v571, 4294901760
        %v573 = vsub.f32 %v571, %v572
        %v574 = vand.u32 %v573, 4294901760
        %575 = vmatmul.mubr.f32.gmra.mrb[0].mxu0 %v574
        %v576 = vpop.f32.mrb[0].mxu0
        %v577 = vadd.f32 0.0, %v576
        %v578 = vpop.f32.mrb[0].mxu0
        %579 = vmatprep.mubr.f32.mxu0 0.0
        %v580 = vand.u32 %v333, 4294901760
        %v581 = vsub.f32 %v333, %v580
        %v582 = vand.u32 %v581, 4294901760
        %v583 = vsub.f32 %v581, %v582
        %v584 = vand.u32 %v583, 4294901760
        %585 = vmatmul.mubr.f32.gmra.mrb[0].mxu0 %v584
        %v586 = vpop.f32.mrb[0].mxu0
        %v587 = vadd.f32 0.0, %v586
        %v588 = vpop.f32.mrb[0].mxu0
        %589 = vmatprep.mubr.f32.mxu0 0.0
        %v590 = vand.u32 %v334, 4294901760
        %v591 = vsub.f32 %v334, %v590
        %v592 = vand.u32 %v591, 4294901760
        %v593 = vsub.f32 %v591, %v592
        %v594 = vand.u32 %v593, 4294901760
        %595 = vmatmul.mubr.f32.gmra.mrb[0].mxu0 %v594
        %v596 = vpop.f32.mrb[0].mxu0
        %v597 = vadd.f32 0.0, %v596
        %v598 = vpop.f32.mrb[0].mxu0
        %599 = vmatprep.mubr.f32.mxu0 0.0
        %v600 = vand.u32 %v335, 4294901760
        %v601 = vsub.f32 %v335, %v600
        %v602 = vand.u32 %v601, 4294901760
        %v603 = vsub.f32 %v601, %v602
        %v604 = vand.u32 %v603, 4294901760
        %605 = vmatmul.mubr.f32.gmra.mrb[0].mxu0 %v604
        %v606 = vpop.f32.mrb[0].mxu0
        %v607 = vadd.f32 0.0, %v606
        %v608 = vpop.f32.mrb[0].mxu0
        %609 = vmatprep.mubr.f32.mxu0 0.0
        %v610 = vand.u32 %v336, 4294901760
        %v611 = vsub.f32 %v336, %v610
        %v612 = vand.u32 %v611, 4294901760
        %v613 = vsub.f32 %v611, %v612
        %v614 = vand.u32 %v613, 4294901760
        %615 = vmatmul.mubr.f32.gmra.mrb[0].mxu0 %v614
        %v616 = vpop.f32.mrb[0].mxu0
        %v617 = vadd.f32 0.0, %v616
        %v618 = vpop.f32.mrb[0].mxu0
        %619 = vmatprep.mubr.f32.mxu0 0.0
        %v620 = vand.u32 %v337, 4294901760
        %v621 = vsub.f32 %v337, %v620
        %v622 = vand.u32 %v621, 4294901760
        %v623 = vsub.f32 %v621, %v622
        %v624 = vand.u32 %v623, 4294901760
        %625 = vmatmul.mubr.f32.gmra.mrb[0].mxu0 %v624
        %v626 = vpop.f32.mrb[0].mxu0
        %v627 = vadd.f32 0.0, %v626
        %v628 = vpop.f32.mrb[0].mxu0
        %629 = vmatprep.mubr.f32.mxu0 0.0
        %v630 = vand.u32 %v338, 4294901760
        %v631 = vsub.f32 %v338, %v630
        %v632 = vand.u32 %v631, 4294901760
        %v633 = vsub.f32 %v631, %v632
        %v634 = vand.u32 %v633, 4294901760
        %635 = vmatmul.mubr.f32.gmra.mrb[0].mxu0 %v634
        %v636 = vpop.f32.mrb[0].mxu0
        %v637 = vadd.f32 0.0, %v636
        %v638 = vpop.f32.mrb[0].mxu0
        %639 = vmatprep.mubr.f32.mxu0 0.0
        %v640 = vand.u32 %v339, 4294901760
        %v641 = vsub.f32 %v339, %v640
        %v642 = vand.u32 %v641, 4294901760
        %v643 = vsub.f32 %v641, %v642
        %v644 = vand.u32 %v643, 4294901760
        %645 = vmatmul.mubr.f32.gmra.mrb[0].mxu0 %v644
        %v646 = vpop.f32.mrb[0].mxu0
        %v647 = vadd.f32 0.0, %v646
        %v648 = vpop.f32.mrb[0].mxu0
        %649 = vmatprep.mubr.f32.mxu0 0.0
        %v650 = vand.u32 %v340, 4294901760
        %v651 = vsub.f32 %v340, %v650
        %v652 = vand.u32 %v651, 4294901760
        %v653 = vsub.f32 %v651, %v652
        %v654 = vand.u32 %v653, 4294901760
        %655 = vmatmul.mubr.f32.gmra.mrb[0].mxu0 %v654
        %v656 = vpop.f32.mrb[0].mxu0
        %v657 = vadd.f32 0.0, %v656
        %v658 = vpop.f32.mrb[0].mxu0
        %659 = vmatprep.mubr.f32.mxu0 0.0
        %v660 = vand.u32 %v341, 4294901760
        %v661 = vsub.f32 %v341, %v660
        %v662 = vand.u32 %v661, 4294901760
        %v663 = vsub.f32 %v661, %v662
        %v664 = vand.u32 %v663, 4294901760
        %665 = vmatmul.mubr.f32.gmra.mrb[0].mxu0 %v664
        %v666 = vpop.f32.mrb[0].mxu0
        %v667 = vadd.f32 0.0, %v666
        %v668 = vpop.f32.mrb[0].mxu0
        %669 = vmatprep.mubr.f32.mxu0 0.0
        %v670 = vand.u32 %v342, 4294901760
        %v671 = vsub.f32 %v342, %v670
        %v672 = vand.u32 %v671, 4294901760
        %v673 = vsub.f32 %v671, %v672
        %v674 = vand.u32 %v673, 4294901760
        %675 = vmatmul.mubr.f32.gmra.mrb[0].mxu0 %v674
        %v676 = vpop.f32.mrb[0].mxu0
        %v677 = vadd.f32 0.0, %v676
        %v678 = vpop.f32.mrb[0].mxu0
        %679 = vmatprep.mubr.f32.mxu0 0.0
        %v680 = vand.u32 %v343, 4294901760
        %v681 = vsub.f32 %v343, %v680
        %v682 = vand.u32 %v681, 4294901760
        %v683 = vsub.f32 %v681, %v682
        %v684 = vand.u32 %v683, 4294901760
        %685 = vmatmul.mubr.f32.gmra.mrb[0].mxu0 %v684
        %v686 = vpop.f32.mrb[0].mxu0
        %v687 = vadd.f32 0.0, %v686
        %v688 = vpop.f32.mrb[0].mxu0
        %689 = vmatprep.mubr.f32.mxu0 0.0
        %v690 = vand.u32 %v344, 4294901760
        %v691 = vsub.f32 %v344, %v690
        %v692 = vand.u32 %v691, 4294901760
        %v693 = vsub.f32 %v691, %v692
        %v694 = vand.u32 %v693, 4294901760
        %695 = vmatmul.mubr.f32.gmra.mrb[0].mxu0 %v694
        %v696 = vpop.f32.mrb[0].mxu0
        %v697 = vadd.f32 0.0, %v696
        %v698 = vpop.f32.mrb[0].mxu0
        %699 = vmatprep.mubr.f32.mxu0 0.0
        %v700 = vand.u32 %v345, 4294901760
        %v701 = vsub.f32 %v345, %v700
        %v702 = vand.u32 %v701, 4294901760
        %v703 = vsub.f32 %v701, %v702
        %v704 = vand.u32 %v703, 4294901760
        %705 = vmatmul.mubr.f32.gmra.mrb[0].mxu0 %v704
        %v706 = vpop.f32.mrb[0].mxu0
        %v707 = vadd.f32 0.0, %v706
        %v708 = vpop.f32.mrb[0].mxu0
        %709 = vmatprep.mubr.f32.mxu0 0.0
        %v710 = vand.u32 %v346, 4294901760
        %v711 = vsub.f32 %v346, %v710
        %v712 = vand.u32 %v711, 4294901760
        %v713 = vsub.f32 %v711, %v712
        %v714 = vand.u32 %v713, 4294901760
        %715 = vmatmul.mubr.f32.gmra.mrb[0].mxu0 %v714
        %v716 = vpop.f32.mrb[0].mxu0
        %v717 = vadd.f32 0.0, %v716
        %v718 = vpop.f32.mrb[0].mxu0
        %719 = vmatprep.mubr.f32.mxu0 0.0
        %v720 = vand.u32 %v347, 4294901760
        %v721 = vsub.f32 %v347, %v720
        %v722 = vand.u32 %v721, 4294901760
        %v723 = vsub.f32 %v721, %v722
        %v724 = vand.u32 %v723, 4294901760
        %725 = vmatmul.mubr.f32.gmra.mrb[0].mxu0 %v724
        %v726 = vpop.f32.mrb[0].mxu0
        %v727 = vadd.f32 0.0, %v726
        %v728 = vpop.f32.mrb[0].mxu0
        %729 = vmatprep.mubr.f32.mxu0 0.0
        %v730 = vand.u32 %v348, 4294901760
        %v731 = vsub.f32 %v348, %v730
        %v732 = vand.u32 %v731, 4294901760
        %v733 = vsub.f32 %v731, %v732
        %v734 = vand.u32 %v733, 4294901760
        %735 = vmatmul.mubr.f32.gmra.mrb[0].mxu0 %v734
        %v736 = vpop.f32.mrb[0].mxu0
        %v737 = vadd.f32 0.0, %v736
        %v738 = vpop.f32.mrb[0].mxu0
        %739 = vmatprep.mubr.f32.mxu0 0.0
        %v740 = vand.u32 %v349, 4294901760
        %v741 = vsub.f32 %v349, %v740
        %v742 = vand.u32 %v741, 4294901760
        %v743 = vsub.f32 %v741, %v742
        %v744 = vand.u32 %v743, 4294901760
        %745 = vmatmul.mubr.f32.gmra.mrb[0].mxu0 %v744
        %v746 = vpop.f32.mrb[0].mxu0
        %v747 = vadd.f32 0.0, %v746
        %v748 = vpop.f32.mrb[0].mxu0
        %749 = vmatprep.mubr.f32.mxu0 0.0
        %v750 = vand.u32 %v350, 4294901760
        %v751 = vsub.f32 %v350, %v750
        %v752 = vand.u32 %v751, 4294901760
        %v753 = vsub.f32 %v751, %v752
        %v754 = vand.u32 %v753, 4294901760
        %755 = vmatmul.mubr.f32.gmra.mrb[0].mxu0 %v754
        %v756 = vpop.f32.mrb[0].mxu0
        %v757 = vadd.f32 0.0, %v756
        %v758 = vpop.f32.mrb[0].mxu0
        %759 = vmatprep.mubr.f32.mxu0 0.0
        %v760 = vand.u32 %v351, 4294901760
        %v761 = vsub.f32 %v351, %v760
        %v762 = vand.u32 %v761, 4294901760
        %v763 = vsub.f32 %v761, %v762
        %v764 = vand.u32 %v763, 4294901760
        %765 = vmatmul.mubr.f32.gmra.mrb[0].mxu0 %v764
        %v766 = vpop.f32.mrb[0].mxu0
        %v767 = vadd.f32 0.0, %v766
        %v768 = vpop.f32.mrb[0].mxu0
        %769 = vdwg.mxu0
        %770 = vmatprep.subr.mxu0 0.0
        %v771 = vand.u32 %v353, 4294901760
        %v772 = vsub.f32 %v353, %v771
        %v773 = vand.u32 %v772, 4294901760
        %v774 = vsub.f32 %v772, %v773
        %v775 = vand.u32 %v774, 4294901760
        %776 = vmatpush1.msra.mxu0 %v775
        %777 = vmatprep.subr.mxu0 0.0
        %v778 = vand.u32 %v354, 4294901760
        %v779 = vsub.f32 %v354, %v778
        %v780 = vand.u32 %v779, 4294901760
        %v781 = vsub.f32 %v779, %v780
        %v782 = vand.u32 %v781, 4294901760
        %783 = vmatpush1.msra.mxu0 %v782
        %784 = vmatprep.subr.mxu0 0.0
        %v785 = vand.u32 %v355, 4294901760
        %v786 = vsub.f32 %v355, %v785
        %v787 = vand.u32 %v786, 4294901760
        %v788 = vsub.f32 %v786, %v787
        %v789 = vand.u32 %v788, 4294901760
        %790 = vmatpush1.msra.mxu0 %v789
        %791 = vmatprep.subr.mxu0 0.0
        %v792 = vand.u32 %v356, 4294901760
        %v793 = vsub.f32 %v356, %v792
        %v794 = vand.u32 %v793, 4294901760
        %v795 = vsub.f32 %v793, %v794
        %v796 = vand.u32 %v795, 4294901760
        %797 = vmatpush1.msra.mxu0 %v796
        %798 = vmatprep.subr.mxu0 0.0
        %v799 = vand.u32 %v357, 4294901760
        %v800 = vsub.f32 %v357, %v799
        %v801 = vand.u32 %v800, 4294901760
        %v802 = vsub.f32 %v800, %v801
        %v803 = vand.u32 %v802, 4294901760
        %804 = vmatpush1.msra.mxu0 %v803
        %805 = vmatprep.subr.mxu0 0.0
        %v806 = vand.u32 %v358, 4294901760
        %v807 = vsub.f32 %v358, %v806
        %v808 = vand.u32 %v807, 4294901760
        %v809 = vsub.f32 %v807, %v808
        %v810 = vand.u32 %v809, 4294901760
        %811 = vmatpush1.msra.mxu0 %v810
        %812 = vmatprep.subr.mxu0 0.0
        %v813 = vand.u32 %v359, 4294901760
        %v814 = vsub.f32 %v359, %v813
        %v815 = vand.u32 %v814, 4294901760
        %v816 = vsub.f32 %v814, %v815
        %v817 = vand.u32 %v816, 4294901760
        %818 = vmatpush1.msra.mxu0 %v817
        %819 = vmatprep.subr.mxu0 0.0
        %v820 = vand.u32 %v360, 4294901760
        %v821 = vsub.f32 %v360, %v820
        %v822 = vand.u32 %v821, 4294901760
        %v823 = vsub.f32 %v821, %v822
        %v824 = vand.u32 %v823, 4294901760
        %825 = vmatpush1.msra.mxu0 %v824
        %826 = vmatprep.subr.mxu0 0.0
        %v827 = vand.u32 %v361, 4294901760
        %v828 = vsub.f32 %v361, %v827
        %v829 = vand.u32 %v828, 4294901760
        %v830 = vsub.f32 %v828, %v829
        %v831 = vand.u32 %v830, 4294901760
        %832 = vmatpush1.msra.mxu0 %v831
        %833 = vmatprep.subr.mxu0 0.0
        %v834 = vand.u32 %v362, 4294901760
        %v835 = vsub.f32 %v362, %v834
        %v836 = vand.u32 %v835, 4294901760
        %v837 = vsub.f32 %v835, %v836
        %v838 = vand.u32 %v837, 4294901760
        %839 = vmatpush1.msra.mxu0 %v838
        %840 = vmatprep.subr.mxu0 0.0
        %v841 = vand.u32 %v363, 4294901760
        %v842 = vsub.f32 %v363, %v841
        %v843 = vand.u32 %v842, 4294901760
        %v844 = vsub.f32 %v842, %v843
        %v845 = vand.u32 %v844, 4294901760
        %846 = vmatpush1.msra.mxu0 %v845
        %847 = vmatprep.subr.mxu0 0.0
        %v848 = vand.u32 %v364, 4294901760
        %v849 = vsub.f32 %v364, %v848
        %v850 = vand.u32 %v849, 4294901760
        %v851 = vsub.f32 %v849, %v850
        %v852 = vand.u32 %v851, 4294901760
        %853 = vmatpush1.msra.mxu0 %v852
        %854 = vmatprep.subr.mxu0 0.0
        %v855 = vand.u32 %v365, 4294901760
        %v856 = vsub.f32 %v365, %v855
        %v857 = vand.u32 %v856, 4294901760
        %v858 = vsub.f32 %v856, %v857
        %v859 = vand.u32 %v858, 4294901760
        %860 = vmatpush1.msra.mxu0 %v859
        %861 = vmatprep.subr.mxu0 0.0
        %v862 = vand.u32 %v366, 4294901760
        %v863 = vsub.f32 %v366, %v862
        %v864 = vand.u32 %v863, 4294901760
        %v865 = vsub.f32 %v863, %v864
        %v866 = vand.u32 %v865, 4294901760
        %867 = vmatpush1.msra.mxu0 %v866
        %868 = vmatprep.subr.mxu0 0.0
        %v869 = vand.u32 %v367, 4294901760
        %v870 = vsub.f32 %v367, %v869
        %v871 = vand.u32 %v870, 4294901760
        %v872 = vsub.f32 %v870, %v871
        %v873 = vand.u32 %v872, 4294901760
        %874 = vmatpush1.msra.mxu0 %v873
        %875 = vmatprep.subr.mxu0 0.0
        %v876 = vand.u32 %v368, 4294901760
        %v877 = vsub.f32 %v368, %v876
        %v878 = vand.u32 %v877, 4294901760
        %v879 = vsub.f32 %v877, %v878
        %v880 = vand.u32 %v879, 4294901760
        %881 = vmatpush1.msra.mxu0 %v880
        %882 = vmatprep.subr.mxu0 0.0
        %883 = vmatpush1.msra.mxu0 0.0
        %884 = vmatprep.subr.mxu0 0.0
        %885 = vmatpush1.msra.mxu0 0.0
        %886 = vmatprep.subr.mxu0 0.0
        %887 = vmatpush1.msra.mxu0 0.0
        %888 = vmatprep.subr.mxu0 0.0
        %889 = vmatpush1.msra.mxu0 0.0
        %890 = vmatprep.subr.mxu0 0.0
        %891 = vmatpush1.msra.mxu0 0.0
        %892 = vmatprep.subr.mxu0 0.0
        %893 = vmatpush1.msra.mxu0 0.0
        %894 = vmatprep.subr.mxu0 0.0
        %895 = vmatpush1.msra.mxu0 0.0
        %896 = vmatprep.subr.mxu0 0.0
        %897 = vmatpush1.msra.mxu0 0.0
        %898 = vmatprep.subr.mxu0 0.0
        %899 = vmatpush1.msra.mxu0 0.0
        %900 = vmatprep.subr.mxu0 0.0
        %901 = vmatpush1.msra.mxu0 0.0
        %902 = vmatprep.subr.mxu0 0.0
        %903 = vmatpush1.msra.mxu0 0.0
        %904 = vmatprep.subr.mxu0 0.0
        %905 = vmatpush1.msra.mxu0 0.0
        %906 = vmatprep.subr.mxu0 0.0
        %907 = vmatpush1.msra.mxu0 0.0
        %908 = vmatprep.subr.mxu0 0.0
        %909 = vmatpush1.msra.mxu0 0.0
        %910 = vmatprep.subr.mxu0 0.0
        %911 = vmatpush1.msra.mxu0 0.0
        %912 = vmatprep.subr.mxu0 0.0
        %913 = vmatpush1.msra.mxu0 0.0
        %914 = vmatprep.mubr.f32.mxu0 0.0
        %v915 = vand.u32 %v320, 4294901760
        %916 = vmatmul.mubr.f32.gmra.mrb[0].mxu0 %v915
        %v917 = vpop.f32.mrb[0].mxu0
        %v918 = vadd.f32 %v457, %v917
        %v919 = vpop.f32.mrb[0].mxu0
        %920 = vmatprep.mubr.f32.mxu0 0.0
        %v921 = vand.u32 %v321, 4294901760
        %922 = vmatmul.mubr.f32.gmra.mrb[0].mxu0 %v921
        %v923 = vpop.f32.mrb[0].mxu0
        %v924 = vadd.f32 %v467, %v923
        %v925 = vpop.f32.mrb[0].mxu0
        %926 = vmatprep.mubr.f32.mxu0 0.0
        %v927 = vand.u32 %v322, 4294901760
        %928 = vmatmul.mubr.f32.gmra.mrb[0].mxu0 %v927
        %v929 = vpop.f32.mrb[0].mxu0
        %v930 = vadd.f32 %v477, %v929
        %v931 = vpop.f32.mrb[0].mxu0
        %932 = vmatprep.mubr.f32.mxu0 0.0
        %v933 = vand.u32 %v323, 4294901760
        %934 = vmatmul.mubr.f32.gmra.mrb[0].mxu0 %v933
        %v935 = vpop.f32.mrb[0].mxu0
        %v936 = vadd.f32 %v487, %v935
        %v937 = vpop.f32.mrb[0].mxu0
        %938 = vmatprep.mubr.f32.mxu0 0.0
        %v939 = vand.u32 %v324, 4294901760
        %940 = vmatmul.mubr.f32.gmra.mrb[0].mxu0 %v939
        %v941 = vpop.f32.mrb[0].mxu0
        %v942 = vadd.f32 %v497, %v941
        %v943 = vpop.f32.mrb[0].mxu0
        %944 = vmatprep.mubr.f32.mxu0 0.0
        %v945 = vand.u32 %v325, 4294901760
        %946 = vmatmul.mubr.f32.gmra.mrb[0].mxu0 %v945
        %v947 = vpop.f32.mrb[0].mxu0
        %v948 = vadd.f32 %v507, %v947
        %v949 = vpop.f32.mrb[0].mxu0
        %950 = vmatprep.mubr.f32.mxu0 0.0
        %v951 = vand.u32 %v326, 4294901760
        %952 = vmatmul.mubr.f32.gmra.mrb[0].mxu0 %v951
        %v953 = vpop.f32.mrb[0].mxu0
        %v954 = vadd.f32 %v517, %v953
        %v955 = vpop.f32.mrb[0].mxu0
        %956 = vmatprep.mubr.f32.mxu0 0.0
        %v957 = vand.u32 %v327, 4294901760
        %958 = vmatmul.mubr.f32.gmra.mrb[0].mxu0 %v957
        %v959 = vpop.f32.mrb[0].mxu0
        %v960 = vadd.f32 %v527, %v959
        %v961 = vpop.f32.mrb[0].mxu0
        %962 = vmatprep.mubr.f32.mxu0 0.0
        %v963 = vand.u32 %v328, 4294901760
        %964 = vmatmul.mubr.f32.gmra.mrb[0].mxu0 %v963
        %v965 = vpop.f32.mrb[0].mxu0
        %v966 = vadd.f32 %v537, %v965
        %v967 = vpop.f32.mrb[0].mxu0
        %968 = vmatprep.mubr.f32.mxu0 0.0
        %v969 = vand.u32 %v329, 4294901760
        %970 = vmatmul.mubr.f32.gmra.mrb[0].mxu0 %v969
        %v971 = vpop.f32.mrb[0].mxu0
        %v972 = vadd.f32 %v547, %v971
        %v973 = vpop.f32.mrb[0].mxu0
        %974 = vmatprep.mubr.f32.mxu0 0.0
        %v975 = vand.u32 %v330, 4294901760
        %976 = vmatmul.mubr.f32.gmra.mrb[0].mxu0 %v975
        %v977 = vpop.f32.mrb[0].mxu0
        %v978 = vadd.f32 %v557, %v977
        %v979 = vpop.f32.mrb[0].mxu0
        %980 = vmatprep.mubr.f32.mxu0 0.0
        %v981 = vand.u32 %v331, 4294901760
        %982 = vmatmul.mubr.f32.gmra.mrb[0].mxu0 %v981
        %v983 = vpop.f32.mrb[0].mxu0
        %v984 = vadd.f32 %v567, %v983
        %v985 = vpop.f32.mrb[0].mxu0
        %986 = vmatprep.mubr.f32.mxu0 0.0
        %v987 = vand.u32 %v332, 4294901760
        %988 = vmatmul.mubr.f32.gmra.mrb[0].mxu0 %v987
        %v989 = vpop.f32.mrb[0].mxu0
        %v990 = vadd.f32 %v577, %v989
        %v991 = vpop.f32.mrb[0].mxu0
        %992 = vmatprep.mubr.f32.mxu0 0.0
        %v993 = vand.u32 %v333, 4294901760
        %994 = vmatmul.mubr.f32.gmra.mrb[0].mxu0 %v993
        %v995 = vpop.f32.mrb[0].mxu0
        %v996 = vadd.f32 %v587, %v995
        %v997 = vpop.f32.mrb[0].mxu0
        %998 = vmatprep.mubr.f32.mxu0 0.0
        %v999 = vand.u32 %v334, 4294901760
        %1000 = vmatmul.mubr.f32.gmra.mrb[0].mxu0 %v999
        %v1001 = vpop.f32.mrb[0].mxu0
        %v1002 = vadd.f32 %v597, %v1001
        %v1003 = vpop.f32.mrb[0].mxu0
        %1004 = vmatprep.mubr.f32.mxu0 0.0
        %v1005 = vand.u32 %v335, 4294901760
        %1006 = vmatmul.mubr.f32.gmra.mrb[0].mxu0 %v1005
        %v1007 = vpop.f32.mrb[0].mxu0
        %v1008 = vadd.f32 %v607, %v1007
        %v1009 = vpop.f32.mrb[0].mxu0
        %1010 = vmatprep.mubr.f32.mxu0 0.0
        %v1011 = vand.u32 %v336, 4294901760
        %1012 = vmatmul.mubr.f32.gmra.mrb[0].mxu0 %v1011
        %v1013 = vpop.f32.mrb[0].mxu0
        %v1014 = vadd.f32 %v617, %v1013
        %v1015 = vpop.f32.mrb[0].mxu0
        %1016 = vmatprep.mubr.f32.mxu0 0.0
        %v1017 = vand.u32 %v337, 4294901760
        %1018 = vmatmul.mubr.f32.gmra.mrb[0].mxu0 %v1017
        %v1019 = vpop.f32.mrb[0].mxu0
        %v1020 = vadd.f32 %v627, %v1019
        %v1021 = vpop.f32.mrb[0].mxu0
        %1022 = vmatprep.mubr.f32.mxu0 0.0
        %v1023 = vand.u32 %v338, 4294901760
        %1024 = vmatmul.mubr.f32.gmra.mrb[0].mxu0 %v1023
        %v1025 = vpop.f32.mrb[0].mxu0
        %v1026 = vadd.f32 %v637, %v1025
        %v1027 = vpop.f32.mrb[0].mxu0
        %1028 = vmatprep.mubr.f32.mxu0 0.0
        %v1029 = vand.u32 %v339, 4294901760
        %1030 = vmatmul.mubr.f32.gmra.mrb[0].mxu0 %v1029
        %v1031 = vpop.f32.mrb[0].mxu0
        %v1032 = vadd.f32 %v647, %v1031
        %v1033 = vpop.f32.mrb[0].mxu0
        %1034 = vmatprep.mubr.f32.mxu0 0.0
        %v1035 = vand.u32 %v340, 4294901760
        %1036 = vmatmul.mubr.f32.gmra.mrb[0].mxu0 %v1035
        %v1037 = vpop.f32.mrb[0].mxu0
        %v1038 = vadd.f32 %v657, %v1037
        %v1039 = vpop.f32.mrb[0].mxu0
        %1040 = vmatprep.mubr.f32.mxu0 0.0
        %v1041 = vand.u32 %v341, 4294901760
        %1042 = vmatmul.mubr.f32.gmra.mrb[0].mxu0 %v1041
        %v1043 = vpop.f32.mrb[0].mxu0
        %v1044 = vadd.f32 %v667, %v1043
        %v1045 = vpop.f32.mrb[0].mxu0
        %1046 = vmatprep.mubr.f32.mxu0 0.0
        %v1047 = vand.u32 %v342, 4294901760
        %1048 = vmatmul.mubr.f32.gmra.mrb[0].mxu0 %v1047
        %v1049 = vpop.f32.mrb[0].mxu0
        %v1050 = vadd.f32 %v677, %v1049
        %v1051 = vpop.f32.mrb[0].mxu0
        %1052 = vmatprep.mubr.f32.mxu0 0.0
        %v1053 = vand.u32 %v343, 4294901760
        %1054 = vmatmul.mubr.f32.gmra.mrb[0].mxu0 %v1053
        %v1055 = vpop.f32.mrb[0].mxu0
        %v1056 = vadd.f32 %v687, %v1055
        %v1057 = vpop.f32.mrb[0].mxu0
        %1058 = vmatprep.mubr.f32.mxu0 0.0
        %v1059 = vand.u32 %v344, 4294901760
        %1060 = vmatmul.mubr.f32.gmra.mrb[0].mxu0 %v1059
        %v1061 = vpop.f32.mrb[0].mxu0
        %v1062 = vadd.f32 %v697, %v1061
        %v1063 = vpop.f32.mrb[0].mxu0
        %1064 = vmatprep.mubr.f32.mxu0 0.0
        %v1065 = vand.u32 %v345, 4294901760
        %1066 = vmatmul.mubr.f32.gmra.mrb[0].mxu0 %v1065
        %v1067 = vpop.f32.mrb[0].mxu0
        %v1068 = vadd.f32 %v707, %v1067
        %v1069 = vpop.f32.mrb[0].mxu0
        %1070 = vmatprep.mubr.f32.mxu0 0.0
        %v1071 = vand.u32 %v346, 4294901760
        %1072 = vmatmul.mubr.f32.gmra.mrb[0].mxu0 %v1071
        %v1073 = vpop.f32.mrb[0].mxu0
        %v1074 = vadd.f32 %v717, %v1073
        %v1075 = vpop.f32.mrb[0].mxu0
        %1076 = vmatprep.mubr.f32.mxu0 0.0
        %v1077 = vand.u32 %v347, 4294901760
        %1078 = vmatmul.mubr.f32.gmra.mrb[0].mxu0 %v1077
        %v1079 = vpop.f32.mrb[0].mxu0
        %v1080 = vadd.f32 %v727, %v1079
        %v1081 = vpop.f32.mrb[0].mxu0
        %1082 = vmatprep.mubr.f32.mxu0 0.0
        %v1083 = vand.u32 %v348, 4294901760
        %1084 = vmatmul.mubr.f32.gmra.mrb[0].mxu0 %v1083
        %v1085 = vpop.f32.mrb[0].mxu0
        %v1086 = vadd.f32 %v737, %v1085
        %v1087 = vpop.f32.mrb[0].mxu0
        %1088 = vmatprep.mubr.f32.mxu0 0.0
        %v1089 = vand.u32 %v349, 4294901760
        %1090 = vmatmul.mubr.f32.gmra.mrb[0].mxu0 %v1089
        %v1091 = vpop.f32.mrb[0].mxu0
        %v1092 = vadd.f32 %v747, %v1091
        %v1093 = vpop.f32.mrb[0].mxu0
        %1094 = vmatprep.mubr.f32.mxu0 0.0
        %v1095 = vand.u32 %v350, 4294901760
        %1096 = vmatmul.mubr.f32.gmra.mrb[0].mxu0 %v1095
        %v1097 = vpop.f32.mrb[0].mxu0
        %v1098 = vadd.f32 %v757, %v1097
        %v1099 = vpop.f32.mrb[0].mxu0
        %1100 = vmatprep.mubr.f32.mxu0 0.0
        %v1101 = vand.u32 %v351, 4294901760
        %1102 = vmatmul.mubr.f32.gmra.mrb[0].mxu0 %v1101
        %v1103 = vpop.f32.mrb[0].mxu0
        %v1104 = vadd.f32 %v767, %v1103
        %v1105 = vpop.f32.mrb[0].mxu0
        %1106 = vdwg.mxu0
        %1107 = vmatprep.subr.mxu0 0.0
        %v1108 = vand.u32 %v353, 4294901760
        %v1109 = vsub.f32 %v353, %v1108
        %1110 = vmatpush1.msra.mxu0 %v1109
        %1111 = vmatprep.subr.mxu0 0.0
        %v1112 = vand.u32 %v354, 4294901760
        %v1113 = vsub.f32 %v354, %v1112
        %1114 = vmatpush1.msra.mxu0 %v1113
        %1115 = vmatprep.subr.mxu0 0.0
        %v1116 = vand.u32 %v355, 4294901760
        %v1117 = vsub.f32 %v355, %v1116
        %1118 = vmatpush1.msra.mxu0 %v1117
        %1119 = vmatprep.subr.mxu0 0.0
        %v1120 = vand.u32 %v356, 4294901760
        %v1121 = vsub.f32 %v356, %v1120
        %1122 = vmatpush1.msra.mxu0 %v1121
        %1123 = vmatprep.subr.mxu0 0.0
        %v1124 = vand.u32 %v357, 4294901760
        %v1125 = vsub.f32 %v357, %v1124
        %1126 = vmatpush1.msra.mxu0 %v1125
        %1127 = vmatprep.subr.mxu0 0.0
        %v1128 = vand.u32 %v358, 4294901760
        %v1129 = vsub.f32 %v358, %v1128
        %1130 = vmatpush1.msra.mxu0 %v1129
        %1131 = vmatprep.subr.mxu0 0.0
        %v1132 = vand.u32 %v359, 4294901760
        %v1133 = vsub.f32 %v359, %v1132
        %1134 = vmatpush1.msra.mxu0 %v1133
        %1135 = vmatprep.subr.mxu0 0.0
        %v1136 = vand.u32 %v360, 4294901760
        %v1137 = vsub.f32 %v360, %v1136
        %1138 = vmatpush1.msra.mxu0 %v1137
        %1139 = vmatprep.subr.mxu0 0.0
        %v1140 = vand.u32 %v361, 4294901760
        %v1141 = vsub.f32 %v361, %v1140
        %1142 = vmatpush1.msra.mxu0 %v1141
        %1143 = vmatprep.subr.mxu0 0.0
        %v1144 = vand.u32 %v362, 4294901760
        %v1145 = vsub.f32 %v362, %v1144
        %1146 = vmatpush1.msra.mxu0 %v1145
        %1147 = vmatprep.subr.mxu0 0.0
        %v1148 = vand.u32 %v363, 4294901760
        %v1149 = vsub.f32 %v363, %v1148
        %1150 = vmatpush1.msra.mxu0 %v1149
        %1151 = vmatprep.subr.mxu0 0.0
        %v1152 = vand.u32 %v364, 4294901760
        %v1153 = vsub.f32 %v364, %v1152
        %1154 = vmatpush1.msra.mxu0 %v1153
        %1155 = vmatprep.subr.mxu0 0.0
        %v1156 = vand.u32 %v365, 4294901760
        %v1157 = vsub.f32 %v365, %v1156
        %1158 = vmatpush1.msra.mxu0 %v1157
        %1159 = vmatprep.subr.mxu0 0.0
        %v1160 = vand.u32 %v366, 4294901760
        %v1161 = vsub.f32 %v366, %v1160
        %1162 = vmatpush1.msra.mxu0 %v1161
        %1163 = vmatprep.subr.mxu0 0.0
        %v1164 = vand.u32 %v367, 4294901760
        %v1165 = vsub.f32 %v367, %v1164
        %1166 = vmatpush1.msra.mxu0 %v1165
        %1167 = vmatprep.subr.mxu0 0.0
        %v1168 = vand.u32 %v368, 4294901760
        %v1169 = vsub.f32 %v368, %v1168
        %1170 = vmatpush1.msra.mxu0 %v1169
        %1171 = vmatprep.subr.mxu0 0.0
        %1172 = vmatpush1.msra.mxu0 0.0
        %1173 = vmatprep.subr.mxu0 0.0
        %1174 = vmatpush1.msra.mxu0 0.0
        %1175 = vmatprep.subr.mxu0 0.0
        %1176 = vmatpush1.msra.mxu0 0.0
        %1177 = vmatprep.subr.mxu0 0.0
        %1178 = vmatpush1.msra.mxu0 0.0
        %1179 = vmatprep.subr.mxu0 0.0
        %1180 = vmatpush1.msra.mxu0 0.0
        %1181 = vmatprep.subr.mxu0 0.0
        %1182 = vmatpush1.msra.mxu0 0.0
        %1183 = vmatprep.subr.mxu0 0.0
        %1184 = vmatpush1.msra.mxu0 0.0
        %1185 = vmatprep.subr.mxu0 0.0
        %1186 = vmatpush1.msra.mxu0 0.0
        %1187 = vmatprep.subr.mxu0 0.0
        %1188 = vmatpush1.msra.mxu0 0.0
        %1189 = vmatprep.subr.mxu0 0.0
        %1190 = vmatpush1.msra.mxu0 0.0
        %1191 = vmatprep.subr.mxu0 0.0
        %1192 = vmatpush1.msra.mxu0 0.0
        %1193 = vmatprep.subr.mxu0 0.0
        %1194 = vmatpush1.msra.mxu0 0.0
        %1195 = vmatprep.subr.mxu0 0.0
        %1196 = vmatpush1.msra.mxu0 0.0
        %1197 = vmatprep.subr.mxu0 0.0
        %1198 = vmatpush1.msra.mxu0 0.0
        %1199 = vmatprep.subr.mxu0 0.0
        %1200 = vmatpush1.msra.mxu0 0.0
        %1201 = vmatprep.subr.mxu0 0.0
        %1202 = vmatpush1.msra.mxu0 0.0
        %1203 = vmatprep.mubr.f32.mxu0 0.0
        %v1204 = vand.u32 %v320, 4294901760
        %v1205 = vsub.f32 %v320, %v1204
        %1206 = vmatmul.mubr.f32.gmra.mrb[0].mxu0 %v1205
        %v1207 = vpop.f32.mrb[0].mxu0
        %v1208 = vadd.f32 %v918, %v1207
        %v1209 = vpop.f32.mrb[0].mxu0
        %1210 = vmatprep.mubr.f32.mxu0 0.0
        %v1211 = vand.u32 %v321, 4294901760
        %v1212 = vsub.f32 %v321, %v1211
        %1213 = vmatmul.mubr.f32.gmra.mrb[0].mxu0 %v1212
        %v1214 = vpop.f32.mrb[0].mxu0
        %v1215 = vadd.f32 %v924, %v1214
        %v1216 = vpop.f32.mrb[0].mxu0
        %1217 = vmatprep.mubr.f32.mxu0 0.0
        %v1218 = vand.u32 %v322, 4294901760
        %v1219 = vsub.f32 %v322, %v1218
        %1220 = vmatmul.mubr.f32.gmra.mrb[0].mxu0 %v1219
        %v1221 = vpop.f32.mrb[0].mxu0
        %v1222 = vadd.f32 %v930, %v1221
        %v1223 = vpop.f32.mrb[0].mxu0
        %1224 = vmatprep.mubr.f32.mxu0 0.0
        %v1225 = vand.u32 %v323, 4294901760
        %v1226 = vsub.f32 %v323, %v1225
        %1227 = vmatmul.mubr.f32.gmra.mrb[0].mxu0 %v1226
        %v1228 = vpop.f32.mrb[0].mxu0
        %v1229 = vadd.f32 %v936, %v1228
        %v1230 = vpop.f32.mrb[0].mxu0
        %1231 = vmatprep.mubr.f32.mxu0 0.0
        %v1232 = vand.u32 %v324, 4294901760
        %v1233 = vsub.f32 %v324, %v1232
        %1234 = vmatmul.mubr.f32.gmra.mrb[0].mxu0 %v1233
        %v1235 = vpop.f32.mrb[0].mxu0
        %v1236 = vadd.f32 %v942, %v1235
        %v1237 = vpop.f32.mrb[0].mxu0
        %1238 = vmatprep.mubr.f32.mxu0 0.0
        %v1239 = vand.u32 %v325, 4294901760
        %v1240 = vsub.f32 %v325, %v1239
        %1241 = vmatmul.mubr.f32.gmra.mrb[0].mxu0 %v1240
        %v1242 = vpop.f32.mrb[0].mxu0
        %v1243 = vadd.f32 %v948, %v1242
        %v1244 = vpop.f32.mrb[0].mxu0
        %1245 = vmatprep.mubr.f32.mxu0 0.0
        %v1246 = vand.u32 %v326, 4294901760
        %v1247 = vsub.f32 %v326, %v1246
        %1248 = vmatmul.mubr.f32.gmra.mrb[0].mxu0 %v1247
        %v1249 = vpop.f32.mrb[0].mxu0
        %v1250 = vadd.f32 %v954, %v1249
        %v1251 = vpop.f32.mrb[0].mxu0
        %1252 = vmatprep.mubr.f32.mxu0 0.0
        %v1253 = vand.u32 %v327, 4294901760
        %v1254 = vsub.f32 %v327, %v1253
        %1255 = vmatmul.mubr.f32.gmra.mrb[0].mxu0 %v1254
        %v1256 = vpop.f32.mrb[0].mxu0
        %v1257 = vadd.f32 %v960, %v1256
        %v1258 = vpop.f32.mrb[0].mxu0
        %1259 = vmatprep.mubr.f32.mxu0 0.0
        %v1260 = vand.u32 %v328, 4294901760
        %v1261 = vsub.f32 %v328, %v1260
        %1262 = vmatmul.mubr.f32.gmra.mrb[0].mxu0 %v1261
        %v1263 = vpop.f32.mrb[0].mxu0
        %v1264 = vadd.f32 %v966, %v1263
        %v1265 = vpop.f32.mrb[0].mxu0
        %1266 = vmatprep.mubr.f32.mxu0 0.0
        %v1267 = vand.u32 %v329, 4294901760
        %v1268 = vsub.f32 %v329, %v1267
        %1269 = vmatmul.mubr.f32.gmra.mrb[0].mxu0 %v1268
        %v1270 = vpop.f32.mrb[0].mxu0
        %v1271 = vadd.f32 %v972, %v1270
        %v1272 = vpop.f32.mrb[0].mxu0
        %1273 = vmatprep.mubr.f32.mxu0 0.0
        %v1274 = vand.u32 %v330, 4294901760
        %v1275 = vsub.f32 %v330, %v1274
        %1276 = vmatmul.mubr.f32.gmra.mrb[0].mxu0 %v1275
        %v1277 = vpop.f32.mrb[0].mxu0
        %v1278 = vadd.f32 %v978, %v1277
        %v1279 = vpop.f32.mrb[0].mxu0
        %1280 = vmatprep.mubr.f32.mxu0 0.0
        %v1281 = vand.u32 %v331, 4294901760
        %v1282 = vsub.f32 %v331, %v1281
        %1283 = vmatmul.mubr.f32.gmra.mrb[0].mxu0 %v1282
        %v1284 = vpop.f32.mrb[0].mxu0
        %v1285 = vadd.f32 %v984, %v1284
        %v1286 = vpop.f32.mrb[0].mxu0
        %1287 = vmatprep.mubr.f32.mxu0 0.0
        %v1288 = vand.u32 %v332, 4294901760
        %v1289 = vsub.f32 %v332, %v1288
        %1290 = vmatmul.mubr.f32.gmra.mrb[0].mxu0 %v1289
        %v1291 = vpop.f32.mrb[0].mxu0
        %v1292 = vadd.f32 %v990, %v1291
        %v1293 = vpop.f32.mrb[0].mxu0
        %1294 = vmatprep.mubr.f32.mxu0 0.0
        %v1295 = vand.u32 %v333, 4294901760
        %v1296 = vsub.f32 %v333, %v1295
        %1297 = vmatmul.mubr.f32.gmra.mrb[0].mxu0 %v1296
        %v1298 = vpop.f32.mrb[0].mxu0
        %v1299 = vadd.f32 %v996, %v1298
        %v1300 = vpop.f32.mrb[0].mxu0
        %1301 = vmatprep.mubr.f32.mxu0 0.0
        %v1302 = vand.u32 %v334, 4294901760
        %v1303 = vsub.f32 %v334, %v1302
        %1304 = vmatmul.mubr.f32.gmra.mrb[0].mxu0 %v1303
        %v1305 = vpop.f32.mrb[0].mxu0
        %v1306 = vadd.f32 %v1002, %v1305
        %v1307 = vpop.f32.mrb[0].mxu0
        %1308 = vmatprep.mubr.f32.mxu0 0.0
        %v1309 = vand.u32 %v335, 4294901760
        %v1310 = vsub.f32 %v335, %v1309
        %1311 = vmatmul.mubr.f32.gmra.mrb[0].mxu0 %v1310
        %v1312 = vpop.f32.mrb[0].mxu0
        %v1313 = vadd.f32 %v1008, %v1312
        %v1314 = vpop.f32.mrb[0].mxu0
        %1315 = vmatprep.mubr.f32.mxu0 0.0
        %v1316 = vand.u32 %v336, 4294901760
        %v1317 = vsub.f32 %v336, %v1316
        %1318 = vmatmul.mubr.f32.gmra.mrb[0].mxu0 %v1317
        %v1319 = vpop.f32.mrb[0].mxu0
        %v1320 = vadd.f32 %v1014, %v1319
        %v1321 = vpop.f32.mrb[0].mxu0
        %1322 = vmatprep.mubr.f32.mxu0 0.0
        %v1323 = vand.u32 %v337, 4294901760
        %v1324 = vsub.f32 %v337, %v1323
        %1325 = vmatmul.mubr.f32.gmra.mrb[0].mxu0 %v1324
        %v1326 = vpop.f32.mrb[0].mxu0
        %v1327 = vadd.f32 %v1020, %v1326
        %v1328 = vpop.f32.mrb[0].mxu0
        %1329 = vmatprep.mubr.f32.mxu0 0.0
        %v1330 = vand.u32 %v338, 4294901760
        %v1331 = vsub.f32 %v338, %v1330
        %1332 = vmatmul.mubr.f32.gmra.mrb[0].mxu0 %v1331
        %v1333 = vpop.f32.mrb[0].mxu0
        %v1334 = vadd.f32 %v1026, %v1333
        %v1335 = vpop.f32.mrb[0].mxu0
        %1336 = vmatprep.mubr.f32.mxu0 0.0
        %v1337 = vand.u32 %v339, 4294901760
        %v1338 = vsub.f32 %v339, %v1337
        %1339 = vmatmul.mubr.f32.gmra.mrb[0].mxu0 %v1338
        %v1340 = vpop.f32.mrb[0].mxu0
        %v1341 = vadd.f32 %v1032, %v1340
        %v1342 = vpop.f32.mrb[0].mxu0
        %1343 = vmatprep.mubr.f32.mxu0 0.0
        %v1344 = vand.u32 %v340, 4294901760
        %v1345 = vsub.f32 %v340, %v1344
        %1346 = vmatmul.mubr.f32.gmra.mrb[0].mxu0 %v1345
        %v1347 = vpop.f32.mrb[0].mxu0
        %v1348 = vadd.f32 %v1038, %v1347
        %v1349 = vpop.f32.mrb[0].mxu0
        %1350 = vmatprep.mubr.f32.mxu0 0.0
        %v1351 = vand.u32 %v341, 4294901760
        %v1352 = vsub.f32 %v341, %v1351
        %1353 = vmatmul.mubr.f32.gmra.mrb[0].mxu0 %v1352
        %v1354 = vpop.f32.mrb[0].mxu0
        %v1355 = vadd.f32 %v1044, %v1354
        %v1356 = vpop.f32.mrb[0].mxu0
        %1357 = vmatprep.mubr.f32.mxu0 0.0
        %v1358 = vand.u32 %v342, 4294901760
        %v1359 = vsub.f32 %v342, %v1358
        %1360 = vmatmul.mubr.f32.gmra.mrb[0].mxu0 %v1359
        %v1361 = vpop.f32.mrb[0].mxu0
        %v1362 = vadd.f32 %v1050, %v1361
        %v1363 = vpop.f32.mrb[0].mxu0
        %1364 = vmatprep.mubr.f32.mxu0 0.0
        %v1365 = vand.u32 %v343, 4294901760
        %v1366 = vsub.f32 %v343, %v1365
        %1367 = vmatmul.mubr.f32.gmra.mrb[0].mxu0 %v1366
        %v1368 = vpop.f32.mrb[0].mxu0
        %v1369 = vadd.f32 %v1056, %v1368
        %v1370 = vpop.f32.mrb[0].mxu0
        %1371 = vmatprep.mubr.f32.mxu0 0.0
        %v1372 = vand.u32 %v344, 4294901760
        %v1373 = vsub.f32 %v344, %v1372
        %1374 = vmatmul.mubr.f32.gmra.mrb[0].mxu0 %v1373
        %v1375 = vpop.f32.mrb[0].mxu0
        %v1376 = vadd.f32 %v1062, %v1375
        %v1377 = vpop.f32.mrb[0].mxu0
        %1378 = vmatprep.mubr.f32.mxu0 0.0
        %v1379 = vand.u32 %v345, 4294901760
        %v1380 = vsub.f32 %v345, %v1379
        %1381 = vmatmul.mubr.f32.gmra.mrb[0].mxu0 %v1380
        %v1382 = vpop.f32.mrb[0].mxu0
        %v1383 = vadd.f32 %v1068, %v1382
        %v1384 = vpop.f32.mrb[0].mxu0
        %1385 = vmatprep.mubr.f32.mxu0 0.0
        %v1386 = vand.u32 %v346, 4294901760
        %v1387 = vsub.f32 %v346, %v1386
        %1388 = vmatmul.mubr.f32.gmra.mrb[0].mxu0 %v1387
        %v1389 = vpop.f32.mrb[0].mxu0
        %v1390 = vadd.f32 %v1074, %v1389
        %v1391 = vpop.f32.mrb[0].mxu0
        %1392 = vmatprep.mubr.f32.mxu0 0.0
        %v1393 = vand.u32 %v347, 4294901760
        %v1394 = vsub.f32 %v347, %v1393
        %1395 = vmatmul.mubr.f32.gmra.mrb[0].mxu0 %v1394
        %v1396 = vpop.f32.mrb[0].mxu0
        %v1397 = vadd.f32 %v1080, %v1396
        %v1398 = vpop.f32.mrb[0].mxu0
        %1399 = vmatprep.mubr.f32.mxu0 0.0
        %v1400 = vand.u32 %v348, 4294901760
        %v1401 = vsub.f32 %v348, %v1400
        %1402 = vmatmul.mubr.f32.gmra.mrb[0].mxu0 %v1401
        %v1403 = vpop.f32.mrb[0].mxu0
        %v1404 = vadd.f32 %v1086, %v1403
        %v1405 = vpop.f32.mrb[0].mxu0
        %1406 = vmatprep.mubr.f32.mxu0 0.0
        %v1407 = vand.u32 %v349, 4294901760
        %v1408 = vsub.f32 %v349, %v1407
        %1409 = vmatmul.mubr.f32.gmra.mrb[0].mxu0 %v1408
        %v1410 = vpop.f32.mrb[0].mxu0
        %v1411 = vadd.f32 %v1092, %v1410
        %v1412 = vpop.f32.mrb[0].mxu0
        %1413 = vmatprep.mubr.f32.mxu0 0.0
        %v1414 = vand.u32 %v350, 4294901760
        %v1415 = vsub.f32 %v350, %v1414
        %1416 = vmatmul.mubr.f32.gmra.mrb[0].mxu0 %v1415
        %v1417 = vpop.f32.mrb[0].mxu0
        %v1418 = vadd.f32 %v1098, %v1417
        %v1419 = vpop.f32.mrb[0].mxu0
        %1420 = vmatprep.mubr.f32.mxu0 0.0
        %v1421 = vand.u32 %v351, 4294901760
        %v1422 = vsub.f32 %v351, %v1421
        %1423 = vmatmul.mubr.f32.gmra.mrb[0].mxu0 %v1422
        %v1424 = vpop.f32.mrb[0].mxu0
        %v1425 = vadd.f32 %v1104, %v1424
        %v1426 = vpop.f32.mrb[0].mxu0
        %1427 = vdwg.mxu0
        %1428 = vmatprep.subr.mxu0 0.0
        %v1429 = vand.u32 %v353, 4294901760
        %1430 = vmatpush1.msra.mxu0 %v1429
        %1431 = vmatprep.subr.mxu0 0.0
        %v1432 = vand.u32 %v354, 4294901760
        %1433 = vmatpush1.msra.mxu0 %v1432
        %1434 = vmatprep.subr.mxu0 0.0
        %v1435 = vand.u32 %v355, 4294901760
        %1436 = vmatpush1.msra.mxu0 %v1435
        %1437 = vmatprep.subr.mxu0 0.0
        %v1438 = vand.u32 %v356, 4294901760
        %1439 = vmatpush1.msra.mxu0 %v1438
        %1440 = vmatprep.subr.mxu0 0.0
        %v1441 = vand.u32 %v357, 4294901760
        %1442 = vmatpush1.msra.mxu0 %v1441
        %1443 = vmatprep.subr.mxu0 0.0
        %v1444 = vand.u32 %v358, 4294901760
        %1445 = vmatpush1.msra.mxu0 %v1444
        %1446 = vmatprep.subr.mxu0 0.0
        %v1447 = vand.u32 %v359, 4294901760
        %1448 = vmatpush1.msra.mxu0 %v1447
        %1449 = vmatprep.subr.mxu0 0.0
        %v1450 = vand.u32 %v360, 4294901760
        %1451 = vmatpush1.msra.mxu0 %v1450
        %1452 = vmatprep.subr.mxu0 0.0
        %v1453 = vand.u32 %v361, 4294901760
        %1454 = vmatpush1.msra.mxu0 %v1453
        %1455 = vmatprep.subr.mxu0 0.0
        %v1456 = vand.u32 %v362, 4294901760
        %1457 = vmatpush1.msra.mxu0 %v1456
        %1458 = vmatprep.subr.mxu0 0.0
        %v1459 = vand.u32 %v363, 4294901760
        %1460 = vmatpush1.msra.mxu0 %v1459
        %1461 = vmatprep.subr.mxu0 0.0
        %v1462 = vand.u32 %v364, 4294901760
        %1463 = vmatpush1.msra.mxu0 %v1462
        %1464 = vmatprep.subr.mxu0 0.0
        %v1465 = vand.u32 %v365, 4294901760
        %1466 = vmatpush1.msra.mxu0 %v1465
        %1467 = vmatprep.subr.mxu0 0.0
        %v1468 = vand.u32 %v366, 4294901760
        %1469 = vmatpush1.msra.mxu0 %v1468
        %1470 = vmatprep.subr.mxu0 0.0
        %v1471 = vand.u32 %v367, 4294901760
        %1472 = vmatpush1.msra.mxu0 %v1471
        %1473 = vmatprep.subr.mxu0 0.0
        %v1474 = vand.u32 %v368, 4294901760
        %1475 = vmatpush1.msra.mxu0 %v1474
        %1476 = vmatprep.subr.mxu0 0.0
        %1477 = vmatpush1.msra.mxu0 0.0
        %1478 = vmatprep.subr.mxu0 0.0
        %1479 = vmatpush1.msra.mxu0 0.0
        %1480 = vmatprep.subr.mxu0 0.0
        %1481 = vmatpush1.msra.mxu0 0.0
        %1482 = vmatprep.subr.mxu0 0.0
        %1483 = vmatpush1.msra.mxu0 0.0
        %1484 = vmatprep.subr.mxu0 0.0
        %1485 = vmatpush1.msra.mxu0 0.0
        %1486 = vmatprep.subr.mxu0 0.0
        %1487 = vmatpush1.msra.mxu0 0.0
        %1488 = vmatprep.subr.mxu0 0.0
        %1489 = vmatpush1.msra.mxu0 0.0
        %1490 = vmatprep.subr.mxu0 0.0
        %1491 = vmatpush1.msra.mxu0 0.0
        %1492 = vmatprep.subr.mxu0 0.0
        %1493 = vmatpush1.msra.mxu0 0.0
        %1494 = vmatprep.subr.mxu0 0.0
        %1495 = vmatpush1.msra.mxu0 0.0
        %1496 = vmatprep.subr.mxu0 0.0
        %1497 = vmatpush1.msra.mxu0 0.0
        %1498 = vmatprep.subr.mxu0 0.0
        %1499 = vmatpush1.msra.mxu0 0.0
        %1500 = vmatprep.subr.mxu0 0.0
        %1501 = vmatpush1.msra.mxu0 0.0
        %1502 = vmatprep.subr.mxu0 0.0
        %1503 = vmatpush1.msra.mxu0 0.0
        %1504 = vmatprep.subr.mxu0 0.0
        %1505 = vmatpush1.msra.mxu0 0.0
        %1506 = vmatprep.subr.mxu0 0.0
        %1507 = vmatpush1.msra.mxu0 0.0
        %1508 = vmatprep.mubr.f32.mxu0 0.0
        %v1509 = vand.u32 %v320, 4294901760
        %v1510 = vsub.f32 %v320, %v1509
        %v1511 = vand.u32 %v1510, 4294901760
        %1512 = vmatmul.mubr.f32.gmra.mrb[0].mxu0 %v1511
        %v1513 = vpop.f32.mrb[0].mxu0
        %v1514 = vadd.f32 %v1208, %v1513
        %v1515 = vpop.f32.mrb[0].mxu0
        %1516 = vmatprep.mubr.f32.mxu0 0.0
        %v1517 = vand.u32 %v321, 4294901760
        %v1518 = vsub.f32 %v321, %v1517
        %v1519 = vand.u32 %v1518, 4294901760
        %1520 = vmatmul.mubr.f32.gmra.mrb[0].mxu0 %v1519
        %v1521 = vpop.f32.mrb[0].mxu0
        %v1522 = vadd.f32 %v1215, %v1521
        %v1523 = vpop.f32.mrb[0].mxu0
        %1524 = vmatprep.mubr.f32.mxu0 0.0
        %v1525 = vand.u32 %v322, 4294901760
        %v1526 = vsub.f32 %v322, %v1525
        %v1527 = vand.u32 %v1526, 4294901760
        %1528 = vmatmul.mubr.f32.gmra.mrb[0].mxu0 %v1527
        %v1529 = vpop.f32.mrb[0].mxu0
        %v1530 = vadd.f32 %v1222, %v1529
        %v1531 = vpop.f32.mrb[0].mxu0
        %1532 = vmatprep.mubr.f32.mxu0 0.0
        %v1533 = vand.u32 %v323, 4294901760
        %v1534 = vsub.f32 %v323, %v1533
        %v1535 = vand.u32 %v1534, 4294901760
        %1536 = vmatmul.mubr.f32.gmra.mrb[0].mxu0 %v1535
        %v1537 = vpop.f32.mrb[0].mxu0
        %v1538 = vadd.f32 %v1229, %v1537
        %v1539 = vpop.f32.mrb[0].mxu0
        %1540 = vmatprep.mubr.f32.mxu0 0.0
        %v1541 = vand.u32 %v324, 4294901760
        %v1542 = vsub.f32 %v324, %v1541
        %v1543 = vand.u32 %v1542, 4294901760
        %1544 = vmatmul.mubr.f32.gmra.mrb[0].mxu0 %v1543
        %v1545 = vpop.f32.mrb[0].mxu0
        %v1546 = vadd.f32 %v1236, %v1545
        %v1547 = vpop.f32.mrb[0].mxu0
        %1548 = vmatprep.mubr.f32.mxu0 0.0
        %v1549 = vand.u32 %v325, 4294901760
        %v1550 = vsub.f32 %v325, %v1549
        %v1551 = vand.u32 %v1550, 4294901760
        %1552 = vmatmul.mubr.f32.gmra.mrb[0].mxu0 %v1551
        %v1553 = vpop.f32.mrb[0].mxu0
        %v1554 = vadd.f32 %v1243, %v1553
        %v1555 = vpop.f32.mrb[0].mxu0
        %1556 = vmatprep.mubr.f32.mxu0 0.0
        %v1557 = vand.u32 %v326, 4294901760
        %v1558 = vsub.f32 %v326, %v1557
        %v1559 = vand.u32 %v1558, 4294901760
        %1560 = vmatmul.mubr.f32.gmra.mrb[0].mxu0 %v1559
        %v1561 = vpop.f32.mrb[0].mxu0
        %v1562 = vadd.f32 %v1250, %v1561
        %v1563 = vpop.f32.mrb[0].mxu0
        %1564 = vmatprep.mubr.f32.mxu0 0.0
        %v1565 = vand.u32 %v327, 4294901760
        %v1566 = vsub.f32 %v327, %v1565
        %v1567 = vand.u32 %v1566, 4294901760
        %1568 = vmatmul.mubr.f32.gmra.mrb[0].mxu0 %v1567
        %v1569 = vpop.f32.mrb[0].mxu0
        %v1570 = vadd.f32 %v1257, %v1569
        %v1571 = vpop.f32.mrb[0].mxu0
        %1572 = vmatprep.mubr.f32.mxu0 0.0
        %v1573 = vand.u32 %v328, 4294901760
        %v1574 = vsub.f32 %v328, %v1573
        %v1575 = vand.u32 %v1574, 4294901760
        %1576 = vmatmul.mubr.f32.gmra.mrb[0].mxu0 %v1575
        %v1577 = vpop.f32.mrb[0].mxu0
        %v1578 = vadd.f32 %v1264, %v1577
        %v1579 = vpop.f32.mrb[0].mxu0
        %1580 = vmatprep.mubr.f32.mxu0 0.0
        %v1581 = vand.u32 %v329, 4294901760
        %v1582 = vsub.f32 %v329, %v1581
        %v1583 = vand.u32 %v1582, 4294901760
        %1584 = vmatmul.mubr.f32.gmra.mrb[0].mxu0 %v1583
        %v1585 = vpop.f32.mrb[0].mxu0
        %v1586 = vadd.f32 %v1271, %v1585
        %v1587 = vpop.f32.mrb[0].mxu0
        %1588 = vmatprep.mubr.f32.mxu0 0.0
        %v1589 = vand.u32 %v330, 4294901760
        %v1590 = vsub.f32 %v330, %v1589
        %v1591 = vand.u32 %v1590, 4294901760
        %1592 = vmatmul.mubr.f32.gmra.mrb[0].mxu0 %v1591
        %v1593 = vpop.f32.mrb[0].mxu0
        %v1594 = vadd.f32 %v1278, %v1593
        %v1595 = vpop.f32.mrb[0].mxu0
        %1596 = vmatprep.mubr.f32.mxu0 0.0
        %v1597 = vand.u32 %v331, 4294901760
        %v1598 = vsub.f32 %v331, %v1597
        %v1599 = vand.u32 %v1598, 4294901760
        %1600 = vmatmul.mubr.f32.gmra.mrb[0].mxu0 %v1599
        %v1601 = vpop.f32.mrb[0].mxu0
        %v1602 = vadd.f32 %v1285, %v1601
        %v1603 = vpop.f32.mrb[0].mxu0
        %1604 = vmatprep.mubr.f32.mxu0 0.0
        %v1605 = vand.u32 %v332, 4294901760
        %v1606 = vsub.f32 %v332, %v1605
        %v1607 = vand.u32 %v1606, 4294901760
        %1608 = vmatmul.mubr.f32.gmra.mrb[0].mxu0 %v1607
        %v1609 = vpop.f32.mrb[0].mxu0
        %v1610 = vadd.f32 %v1292, %v1609
        %v1611 = vpop.f32.mrb[0].mxu0
        %1612 = vmatprep.mubr.f32.mxu0 0.0
        %v1613 = vand.u32 %v333, 4294901760
        %v1614 = vsub.f32 %v333, %v1613
        %v1615 = vand.u32 %v1614, 4294901760
        %1616 = vmatmul.mubr.f32.gmra.mrb[0].mxu0 %v1615
        %v1617 = vpop.f32.mrb[0].mxu0
        %v1618 = vadd.f32 %v1299, %v1617
        %v1619 = vpop.f32.mrb[0].mxu0
        %1620 = vmatprep.mubr.f32.mxu0 0.0
        %v1621 = vand.u32 %v334, 4294901760
        %v1622 = vsub.f32 %v334, %v1621
        %v1623 = vand.u32 %v1622, 4294901760
        %1624 = vmatmul.mubr.f32.gmra.mrb[0].mxu0 %v1623
        %v1625 = vpop.f32.mrb[0].mxu0
        %v1626 = vadd.f32 %v1306, %v1625
        %v1627 = vpop.f32.mrb[0].mxu0
        %1628 = vmatprep.mubr.f32.mxu0 0.0
        %v1629 = vand.u32 %v335, 4294901760
        %v1630 = vsub.f32 %v335, %v1629
        %v1631 = vand.u32 %v1630, 4294901760
        %1632 = vmatmul.mubr.f32.gmra.mrb[0].mxu0 %v1631
        %v1633 = vpop.f32.mrb[0].mxu0
        %v1634 = vadd.f32 %v1313, %v1633
        %v1635 = vpop.f32.mrb[0].mxu0
        %1636 = vmatprep.mubr.f32.mxu0 0.0
        %v1637 = vand.u32 %v336, 4294901760
        %v1638 = vsub.f32 %v336, %v1637
        %v1639 = vand.u32 %v1638, 4294901760
        %1640 = vmatmul.mubr.f32.gmra.mrb[0].mxu0 %v1639
        %v1641 = vpop.f32.mrb[0].mxu0
        %v1642 = vadd.f32 %v1320, %v1641
        %v1643 = vpop.f32.mrb[0].mxu0
        %1644 = vmatprep.mubr.f32.mxu0 0.0
        %v1645 = vand.u32 %v337, 4294901760
        %v1646 = vsub.f32 %v337, %v1645
        %v1647 = vand.u32 %v1646, 4294901760
        %1648 = vmatmul.mubr.f32.gmra.mrb[0].mxu0 %v1647
        %v1649 = vpop.f32.mrb[0].mxu0
        %v1650 = vadd.f32 %v1327, %v1649
        %v1651 = vpop.f32.mrb[0].mxu0
        %1652 = vmatprep.mubr.f32.mxu0 0.0
        %v1653 = vand.u32 %v338, 4294901760
        %v1654 = vsub.f32 %v338, %v1653
        %v1655 = vand.u32 %v1654, 4294901760
        %1656 = vmatmul.mubr.f32.gmra.mrb[0].mxu0 %v1655
        %v1657 = vpop.f32.mrb[0].mxu0
        %v1658 = vadd.f32 %v1334, %v1657
        %v1659 = vpop.f32.mrb[0].mxu0
        %1660 = vmatprep.mubr.f32.mxu0 0.0
        %v1661 = vand.u32 %v339, 4294901760
        %v1662 = vsub.f32 %v339, %v1661
        %v1663 = vand.u32 %v1662, 4294901760
        %1664 = vmatmul.mubr.f32.gmra.mrb[0].mxu0 %v1663
        %v1665 = vpop.f32.mrb[0].mxu0
        %v1666 = vadd.f32 %v1341, %v1665
        %v1667 = vpop.f32.mrb[0].mxu0
        %1668 = vmatprep.mubr.f32.mxu0 0.0
        %v1669 = vand.u32 %v340, 4294901760
        %v1670 = vsub.f32 %v340, %v1669
        %v1671 = vand.u32 %v1670, 4294901760
        %1672 = vmatmul.mubr.f32.gmra.mrb[0].mxu0 %v1671
        %v1673 = vpop.f32.mrb[0].mxu0
        %v1674 = vadd.f32 %v1348, %v1673
        %v1675 = vpop.f32.mrb[0].mxu0
        %1676 = vmatprep.mubr.f32.mxu0 0.0
        %v1677 = vand.u32 %v341, 4294901760
        %v1678 = vsub.f32 %v341, %v1677
        %v1679 = vand.u32 %v1678, 4294901760
        %1680 = vmatmul.mubr.f32.gmra.mrb[0].mxu0 %v1679
        %v1681 = vpop.f32.mrb[0].mxu0
        %v1682 = vadd.f32 %v1355, %v1681
        %v1683 = vpop.f32.mrb[0].mxu0
        %1684 = vmatprep.mubr.f32.mxu0 0.0
        %v1685 = vand.u32 %v342, 4294901760
        %v1686 = vsub.f32 %v342, %v1685
        %v1687 = vand.u32 %v1686, 4294901760
        %1688 = vmatmul.mubr.f32.gmra.mrb[0].mxu0 %v1687
        %v1689 = vpop.f32.mrb[0].mxu0
        %v1690 = vadd.f32 %v1362, %v1689
        %v1691 = vpop.f32.mrb[0].mxu0
        %1692 = vmatprep.mubr.f32.mxu0 0.0
        %v1693 = vand.u32 %v343, 4294901760
        %v1694 = vsub.f32 %v343, %v1693
        %v1695 = vand.u32 %v1694, 4294901760
        %1696 = vmatmul.mubr.f32.gmra.mrb[0].mxu0 %v1695
        %v1697 = vpop.f32.mrb[0].mxu0
        %v1698 = vadd.f32 %v1369, %v1697
        %v1699 = vpop.f32.mrb[0].mxu0
        %1700 = vmatprep.mubr.f32.mxu0 0.0
        %v1701 = vand.u32 %v344, 4294901760
        %v1702 = vsub.f32 %v344, %v1701
        %v1703 = vand.u32 %v1702, 4294901760
        %1704 = vmatmul.mubr.f32.gmra.mrb[0].mxu0 %v1703
        %v1705 = vpop.f32.mrb[0].mxu0
        %v1706 = vadd.f32 %v1376, %v1705
        %v1707 = vpop.f32.mrb[0].mxu0
        %1708 = vmatprep.mubr.f32.mxu0 0.0
        %v1709 = vand.u32 %v345, 4294901760
        %v1710 = vsub.f32 %v345, %v1709
        %v1711 = vand.u32 %v1710, 4294901760
        %1712 = vmatmul.mubr.f32.gmra.mrb[0].mxu0 %v1711
        %v1713 = vpop.f32.mrb[0].mxu0
        %v1714 = vadd.f32 %v1383, %v1713
        %v1715 = vpop.f32.mrb[0].mxu0
        %1716 = vmatprep.mubr.f32.mxu0 0.0
        %v1717 = vand.u32 %v346, 4294901760
        %v1718 = vsub.f32 %v346, %v1717
        %v1719 = vand.u32 %v1718, 4294901760
        %1720 = vmatmul.mubr.f32.gmra.mrb[0].mxu0 %v1719
        %v1721 = vpop.f32.mrb[0].mxu0
        %v1722 = vadd.f32 %v1390, %v1721
        %v1723 = vpop.f32.mrb[0].mxu0
        %1724 = vmatprep.mubr.f32.mxu0 0.0
        %v1725 = vand.u32 %v347, 4294901760
        %v1726 = vsub.f32 %v347, %v1725
        %v1727 = vand.u32 %v1726, 4294901760
        %1728 = vmatmul.mubr.f32.gmra.mrb[0].mxu0 %v1727
        %v1729 = vpop.f32.mrb[0].mxu0
        %v1730 = vadd.f32 %v1397, %v1729
        %v1731 = vpop.f32.mrb[0].mxu0
        %1732 = vmatprep.mubr.f32.mxu0 0.0
        %v1733 = vand.u32 %v348, 4294901760
        %v1734 = vsub.f32 %v348, %v1733
        %v1735 = vand.u32 %v1734, 4294901760
        %1736 = vmatmul.mubr.f32.gmra.mrb[0].mxu0 %v1735
        %v1737 = vpop.f32.mrb[0].mxu0
        %v1738 = vadd.f32 %v1404, %v1737
        %v1739 = vpop.f32.mrb[0].mxu0
        %1740 = vmatprep.mubr.f32.mxu0 0.0
        %v1741 = vand.u32 %v349, 4294901760
        %v1742 = vsub.f32 %v349, %v1741
        %v1743 = vand.u32 %v1742, 4294901760
        %1744 = vmatmul.mubr.f32.gmra.mrb[0].mxu0 %v1743
        %v1745 = vpop.f32.mrb[0].mxu0
        %v1746 = vadd.f32 %v1411, %v1745
        %v1747 = vpop.f32.mrb[0].mxu0
        %1748 = vmatprep.mubr.f32.mxu0 0.0
        %v1749 = vand.u32 %v350, 4294901760
        %v1750 = vsub.f32 %v350, %v1749
        %v1751 = vand.u32 %v1750, 4294901760
        %1752 = vmatmul.mubr.f32.gmra.mrb[0].mxu0 %v1751
        %v1753 = vpop.f32.mrb[0].mxu0
        %v1754 = vadd.f32 %v1418, %v1753
        %v1755 = vpop.f32.mrb[0].mxu0
        %1756 = vmatprep.mubr.f32.mxu0 0.0
        %v1757 = vand.u32 %v351, 4294901760
        %v1758 = vsub.f32 %v351, %v1757
        %v1759 = vand.u32 %v1758, 4294901760
        %1760 = vmatmul.mubr.f32.gmra.mrb[0].mxu0 %v1759
        %v1761 = vpop.f32.mrb[0].mxu0
        %v1762 = vadd.f32 %v1425, %v1761
        %v1763 = vpop.f32.mrb[0].mxu0
        %1764 = vdwg.mxu0
        %1765 = vmatprep.subr.mxu0 0.0
        %v1766 = vand.u32 %v353, 4294901760
        %v1767 = vsub.f32 %v353, %v1766
        %v1768 = vand.u32 %v1767, 4294901760
        %1769 = vmatpush1.msra.mxu0 %v1768
        %1770 = vmatprep.subr.mxu0 0.0
        %v1771 = vand.u32 %v354, 4294901760
        %v1772 = vsub.f32 %v354, %v1771
        %v1773 = vand.u32 %v1772, 4294901760
        %1774 = vmatpush1.msra.mxu0 %v1773
        %1775 = vmatprep.subr.mxu0 0.0
        %v1776 = vand.u32 %v355, 4294901760
        %v1777 = vsub.f32 %v355, %v1776
        %v1778 = vand.u32 %v1777, 4294901760
        %1779 = vmatpush1.msra.mxu0 %v1778
        %1780 = vmatprep.subr.mxu0 0.0
        %v1781 = vand.u32 %v356, 4294901760
        %v1782 = vsub.f32 %v356, %v1781
        %v1783 = vand.u32 %v1782, 4294901760
        %1784 = vmatpush1.msra.mxu0 %v1783
        %1785 = vmatprep.subr.mxu0 0.0
        %v1786 = vand.u32 %v357, 4294901760
        %v1787 = vsub.f32 %v357, %v1786
        %v1788 = vand.u32 %v1787, 4294901760
        %1789 = vmatpush1.msra.mxu0 %v1788
        %1790 = vmatprep.subr.mxu0 0.0
        %v1791 = vand.u32 %v358, 4294901760
        %v1792 = vsub.f32 %v358, %v1791
        %v1793 = vand.u32 %v1792, 4294901760
        %1794 = vmatpush1.msra.mxu0 %v1793
        %1795 = vmatprep.subr.mxu0 0.0
        %v1796 = vand.u32 %v359, 4294901760
        %v1797 = vsub.f32 %v359, %v1796
        %v1798 = vand.u32 %v1797, 4294901760
        %1799 = vmatpush1.msra.mxu0 %v1798
        %1800 = vmatprep.subr.mxu0 0.0
        %v1801 = vand.u32 %v360, 4294901760
        %v1802 = vsub.f32 %v360, %v1801
        %v1803 = vand.u32 %v1802, 4294901760
        %1804 = vmatpush1.msra.mxu0 %v1803
        %1805 = vmatprep.subr.mxu0 0.0
        %v1806 = vand.u32 %v361, 4294901760
        %v1807 = vsub.f32 %v361, %v1806
        %v1808 = vand.u32 %v1807, 4294901760
        %1809 = vmatpush1.msra.mxu0 %v1808
        %1810 = vmatprep.subr.mxu0 0.0
        %v1811 = vand.u32 %v362, 4294901760
        %v1812 = vsub.f32 %v362, %v1811
        %v1813 = vand.u32 %v1812, 4294901760
        %1814 = vmatpush1.msra.mxu0 %v1813
        %1815 = vmatprep.subr.mxu0 0.0
        %v1816 = vand.u32 %v363, 4294901760
        %v1817 = vsub.f32 %v363, %v1816
        %v1818 = vand.u32 %v1817, 4294901760
        %1819 = vmatpush1.msra.mxu0 %v1818
        %1820 = vmatprep.subr.mxu0 0.0
        %v1821 = vand.u32 %v364, 4294901760
        %v1822 = vsub.f32 %v364, %v1821
        %v1823 = vand.u32 %v1822, 4294901760
        %1824 = vmatpush1.msra.mxu0 %v1823
        %1825 = vmatprep.subr.mxu0 0.0
        %v1826 = vand.u32 %v365, 4294901760
        %v1827 = vsub.f32 %v365, %v1826
        %v1828 = vand.u32 %v1827, 4294901760
        %1829 = vmatpush1.msra.mxu0 %v1828
        %1830 = vmatprep.subr.mxu0 0.0
        %v1831 = vand.u32 %v366, 4294901760
        %v1832 = vsub.f32 %v366, %v1831
        %v1833 = vand.u32 %v1832, 4294901760
        %1834 = vmatpush1.msra.mxu0 %v1833
        %1835 = vmatprep.subr.mxu0 0.0
        %v1836 = vand.u32 %v367, 4294901760
        %v1837 = vsub.f32 %v367, %v1836
        %v1838 = vand.u32 %v1837, 4294901760
        %1839 = vmatpush1.msra.mxu0 %v1838
        %1840 = vmatprep.subr.mxu0 0.0
        %v1841 = vand.u32 %v368, 4294901760
        %v1842 = vsub.f32 %v368, %v1841
        %v1843 = vand.u32 %v1842, 4294901760
        %1844 = vmatpush1.msra.mxu0 %v1843
        %1845 = vmatprep.subr.mxu0 0.0
        %1846 = vmatpush1.msra.mxu0 0.0
        %1847 = vmatprep.subr.mxu0 0.0
        %1848 = vmatpush1.msra.mxu0 0.0
        %1849 = vmatprep.subr.mxu0 0.0
        %1850 = vmatpush1.msra.mxu0 0.0
        %1851 = vmatprep.subr.mxu0 0.0
        %1852 = vmatpush1.msra.mxu0 0.0
        %1853 = vmatprep.subr.mxu0 0.0
        %1854 = vmatpush1.msra.mxu0 0.0
        %1855 = vmatprep.subr.mxu0 0.0
        %1856 = vmatpush1.msra.mxu0 0.0
        %1857 = vmatprep.subr.mxu0 0.0
        %1858 = vmatpush1.msra.mxu0 0.0
        %1859 = vmatprep.subr.mxu0 0.0
        %1860 = vmatpush1.msra.mxu0 0.0
        %1861 = vmatprep.subr.mxu0 0.0
        %1862 = vmatpush1.msra.mxu0 0.0
        %1863 = vmatprep.subr.mxu0 0.0
        %1864 = vmatpush1.msra.mxu0 0.0
        %1865 = vmatprep.subr.mxu0 0.0
        %1866 = vmatpush1.msra.mxu0 0.0
        %1867 = vmatprep.subr.mxu0 0.0
        %1868 = vmatpush1.msra.mxu0 0.0
        %1869 = vmatprep.subr.mxu0 0.0
        %1870 = vmatpush1.msra.mxu0 0.0
        %1871 = vmatprep.subr.mxu0 0.0
        %1872 = vmatpush1.msra.mxu0 0.0
        %1873 = vmatprep.subr.mxu0 0.0
        %1874 = vmatpush1.msra.mxu0 0.0
        %1875 = vmatprep.subr.mxu0 0.0
        %1876 = vmatpush1.msra.mxu0 0.0
        %1877 = vmatprep.mubr.f32.mxu0 0.0
        %v1878 = vand.u32 %v320, 4294901760
        %1879 = vmatmul.mubr.f32.gmra.mrb[0].mxu0 %v1878
        %v1880 = vpop.f32.mrb[0].mxu0
        %v1881 = vadd.f32 %v1514, %v1880
        %v1882 = vpop.f32.mrb[0].mxu0
        %1883 = vmatprep.mubr.f32.mxu0 0.0
        %v1884 = vand.u32 %v321, 4294901760
        %1885 = vmatmul.mubr.f32.gmra.mrb[0].mxu0 %v1884
        %v1886 = vpop.f32.mrb[0].mxu0
        %v1887 = vadd.f32 %v1522, %v1886
        %v1888 = vpop.f32.mrb[0].mxu0
        %1889 = vmatprep.mubr.f32.mxu0 0.0
        %v1890 = vand.u32 %v322, 4294901760
        %1891 = vmatmul.mubr.f32.gmra.mrb[0].mxu0 %v1890
        %v1892 = vpop.f32.mrb[0].mxu0
        %v1893 = vadd.f32 %v1530, %v1892
        %v1894 = vpop.f32.mrb[0].mxu0
        %1895 = vmatprep.mubr.f32.mxu0 0.0
        %v1896 = vand.u32 %v323, 4294901760
        %1897 = vmatmul.mubr.f32.gmra.mrb[0].mxu0 %v1896
        %v1898 = vpop.f32.mrb[0].mxu0
        %v1899 = vadd.f32 %v1538, %v1898
        %v1900 = vpop.f32.mrb[0].mxu0
        %1901 = vmatprep.mubr.f32.mxu0 0.0
        %v1902 = vand.u32 %v324, 4294901760
        %1903 = vmatmul.mubr.f32.gmra.mrb[0].mxu0 %v1902
        %v1904 = vpop.f32.mrb[0].mxu0
        %v1905 = vadd.f32 %v1546, %v1904
        %v1906 = vpop.f32.mrb[0].mxu0
        %1907 = vmatprep.mubr.f32.mxu0 0.0
        %v1908 = vand.u32 %v325, 4294901760
        %1909 = vmatmul.mubr.f32.gmra.mrb[0].mxu0 %v1908
        %v1910 = vpop.f32.mrb[0].mxu0
        %v1911 = vadd.f32 %v1554, %v1910
        %v1912 = vpop.f32.mrb[0].mxu0
        %1913 = vmatprep.mubr.f32.mxu0 0.0
        %v1914 = vand.u32 %v326, 4294901760
        %1915 = vmatmul.mubr.f32.gmra.mrb[0].mxu0 %v1914
        %v1916 = vpop.f32.mrb[0].mxu0
        %v1917 = vadd.f32 %v1562, %v1916
        %v1918 = vpop.f32.mrb[0].mxu0
        %1919 = vmatprep.mubr.f32.mxu0 0.0
        %v1920 = vand.u32 %v327, 4294901760
        %1921 = vmatmul.mubr.f32.gmra.mrb[0].mxu0 %v1920
        %v1922 = vpop.f32.mrb[0].mxu0
        %v1923 = vadd.f32 %v1570, %v1922
        %v1924 = vpop.f32.mrb[0].mxu0
        %1925 = vmatprep.mubr.f32.mxu0 0.0
        %v1926 = vand.u32 %v328, 4294901760
        %1927 = vmatmul.mubr.f32.gmra.mrb[0].mxu0 %v1926
        %v1928 = vpop.f32.mrb[0].mxu0
        %v1929 = vadd.f32 %v1578, %v1928
        %v1930 = vpop.f32.mrb[0].mxu0
        %1931 = vmatprep.mubr.f32.mxu0 0.0
        %v1932 = vand.u32 %v329, 4294901760
        %1933 = vmatmul.mubr.f32.gmra.mrb[0].mxu0 %v1932
        %v1934 = vpop.f32.mrb[0].mxu0
        %v1935 = vadd.f32 %v1586, %v1934
        %v1936 = vpop.f32.mrb[0].mxu0
        %1937 = vmatprep.mubr.f32.mxu0 0.0
        %v1938 = vand.u32 %v330, 4294901760
        %1939 = vmatmul.mubr.f32.gmra.mrb[0].mxu0 %v1938
        %v1940 = vpop.f32.mrb[0].mxu0
        %v1941 = vadd.f32 %v1594, %v1940
        %v1942 = vpop.f32.mrb[0].mxu0
        %1943 = vmatprep.mubr.f32.mxu0 0.0
        %v1944 = vand.u32 %v331, 4294901760
        %1945 = vmatmul.mubr.f32.gmra.mrb[0].mxu0 %v1944
        %v1946 = vpop.f32.mrb[0].mxu0
        %v1947 = vadd.f32 %v1602, %v1946
        %v1948 = vpop.f32.mrb[0].mxu0
        %1949 = vmatprep.mubr.f32.mxu0 0.0
        %v1950 = vand.u32 %v332, 4294901760
        %1951 = vmatmul.mubr.f32.gmra.mrb[0].mxu0 %v1950
        %v1952 = vpop.f32.mrb[0].mxu0
        %v1953 = vadd.f32 %v1610, %v1952
        %v1954 = vpop.f32.mrb[0].mxu0
        %1955 = vmatprep.mubr.f32.mxu0 0.0
        %v1956 = vand.u32 %v333, 4294901760
        %1957 = vmatmul.mubr.f32.gmra.mrb[0].mxu0 %v1956
        %v1958 = vpop.f32.mrb[0].mxu0
        %v1959 = vadd.f32 %v1618, %v1958
        %v1960 = vpop.f32.mrb[0].mxu0
        %1961 = vmatprep.mubr.f32.mxu0 0.0
        %v1962 = vand.u32 %v334, 4294901760
        %1963 = vmatmul.mubr.f32.gmra.mrb[0].mxu0 %v1962
        %v1964 = vpop.f32.mrb[0].mxu0
        %v1965 = vadd.f32 %v1626, %v1964
        %v1966 = vpop.f32.mrb[0].mxu0
        %1967 = vmatprep.mubr.f32.mxu0 0.0
        %v1968 = vand.u32 %v335, 4294901760
        %1969 = vmatmul.mubr.f32.gmra.mrb[0].mxu0 %v1968
        %v1970 = vpop.f32.mrb[0].mxu0
        %v1971 = vadd.f32 %v1634, %v1970
        %v1972 = vpop.f32.mrb[0].mxu0
        %1973 = vmatprep.mubr.f32.mxu0 0.0
        %v1974 = vand.u32 %v336, 4294901760
        %1975 = vmatmul.mubr.f32.gmra.mrb[0].mxu0 %v1974
        %v1976 = vpop.f32.mrb[0].mxu0
        %v1977 = vadd.f32 %v1642, %v1976
        %v1978 = vpop.f32.mrb[0].mxu0
        %1979 = vmatprep.mubr.f32.mxu0 0.0
        %v1980 = vand.u32 %v337, 4294901760
        %1981 = vmatmul.mubr.f32.gmra.mrb[0].mxu0 %v1980
        %v1982 = vpop.f32.mrb[0].mxu0
        %v1983 = vadd.f32 %v1650, %v1982
        %v1984 = vpop.f32.mrb[0].mxu0
        %1985 = vmatprep.mubr.f32.mxu0 0.0
        %v1986 = vand.u32 %v338, 4294901760
        %1987 = vmatmul.mubr.f32.gmra.mrb[0].mxu0 %v1986
        %v1988 = vpop.f32.mrb[0].mxu0
        %v1989 = vadd.f32 %v1658, %v1988
        %v1990 = vpop.f32.mrb[0].mxu0
        %1991 = vmatprep.mubr.f32.mxu0 0.0
        %v1992 = vand.u32 %v339, 4294901760
        %1993 = vmatmul.mubr.f32.gmra.mrb[0].mxu0 %v1992
        %v1994 = vpop.f32.mrb[0].mxu0
        %v1995 = vadd.f32 %v1666, %v1994
        %v1996 = vpop.f32.mrb[0].mxu0
        %1997 = vmatprep.mubr.f32.mxu0 0.0
        %v1998 = vand.u32 %v340, 4294901760
        %1999 = vmatmul.mubr.f32.gmra.mrb[0].mxu0 %v1998
        %v2000 = vpop.f32.mrb[0].mxu0
        %v2001 = vadd.f32 %v1674, %v2000
        %v2002 = vpop.f32.mrb[0].mxu0
        %2003 = vmatprep.mubr.f32.mxu0 0.0
        %v2004 = vand.u32 %v341, 4294901760
        %2005 = vmatmul.mubr.f32.gmra.mrb[0].mxu0 %v2004
        %v2006 = vpop.f32.mrb[0].mxu0
        %v2007 = vadd.f32 %v1682, %v2006
        %v2008 = vpop.f32.mrb[0].mxu0
        %2009 = vmatprep.mubr.f32.mxu0 0.0
        %v2010 = vand.u32 %v342, 4294901760
        %2011 = vmatmul.mubr.f32.gmra.mrb[0].mxu0 %v2010
        %v2012 = vpop.f32.mrb[0].mxu0
        %v2013 = vadd.f32 %v1690, %v2012
        %v2014 = vpop.f32.mrb[0].mxu0
        %2015 = vmatprep.mubr.f32.mxu0 0.0
        %v2016 = vand.u32 %v343, 4294901760
        %2017 = vmatmul.mubr.f32.gmra.mrb[0].mxu0 %v2016
        %v2018 = vpop.f32.mrb[0].mxu0
        %v2019 = vadd.f32 %v1698, %v2018
        %v2020 = vpop.f32.mrb[0].mxu0
        %2021 = vmatprep.mubr.f32.mxu0 0.0
        %v2022 = vand.u32 %v344, 4294901760
        %2023 = vmatmul.mubr.f32.gmra.mrb[0].mxu0 %v2022
        %v2024 = vpop.f32.mrb[0].mxu0
        %v2025 = vadd.f32 %v1706, %v2024
        %v2026 = vpop.f32.mrb[0].mxu0
        %2027 = vmatprep.mubr.f32.mxu0 0.0
        %v2028 = vand.u32 %v345, 4294901760
        %2029 = vmatmul.mubr.f32.gmra.mrb[0].mxu0 %v2028
        %v2030 = vpop.f32.mrb[0].mxu0
        %v2031 = vadd.f32 %v1714, %v2030
        %v2032 = vpop.f32.mrb[0].mxu0
        %2033 = vmatprep.mubr.f32.mxu0 0.0
        %v2034 = vand.u32 %v346, 4294901760
        %2035 = vmatmul.mubr.f32.gmra.mrb[0].mxu0 %v2034
        %v2036 = vpop.f32.mrb[0].mxu0
        %v2037 = vadd.f32 %v1722, %v2036
        %v2038 = vpop.f32.mrb[0].mxu0
        %2039 = vmatprep.mubr.f32.mxu0 0.0
        %v2040 = vand.u32 %v347, 4294901760
        %2041 = vmatmul.mubr.f32.gmra.mrb[0].mxu0 %v2040
        %v2042 = vpop.f32.mrb[0].mxu0
        %v2043 = vadd.f32 %v1730, %v2042
        %v2044 = vpop.f32.mrb[0].mxu0
        %2045 = vmatprep.mubr.f32.mxu0 0.0
        %v2046 = vand.u32 %v348, 4294901760
        %2047 = vmatmul.mubr.f32.gmra.mrb[0].mxu0 %v2046
        %v2048 = vpop.f32.mrb[0].mxu0
        %v2049 = vadd.f32 %v1738, %v2048
        %v2050 = vpop.f32.mrb[0].mxu0
        %2051 = vmatprep.mubr.f32.mxu0 0.0
        %v2052 = vand.u32 %v349, 4294901760
        %2053 = vmatmul.mubr.f32.gmra.mrb[0].mxu0 %v2052
        %v2054 = vpop.f32.mrb[0].mxu0
        %v2055 = vadd.f32 %v1746, %v2054
        %v2056 = vpop.f32.mrb[0].mxu0
        %2057 = vmatprep.mubr.f32.mxu0 0.0
        %v2058 = vand.u32 %v350, 4294901760
        %2059 = vmatmul.mubr.f32.gmra.mrb[0].mxu0 %v2058
        %v2060 = vpop.f32.mrb[0].mxu0
        %v2061 = vadd.f32 %v1754, %v2060
        %v2062 = vpop.f32.mrb[0].mxu0
        %2063 = vmatprep.mubr.f32.mxu0 0.0
        %v2064 = vand.u32 %v351, 4294901760
        %2065 = vmatmul.mubr.f32.gmra.mrb[0].mxu0 %v2064
        %v2066 = vpop.f32.mrb[0].mxu0
        %v2067 = vadd.f32 %v1762, %v2066
        %v2068 = vpop.f32.mrb[0].mxu0
        %2069 = vdwg.mxu0
        %2070 = vmatprep.subr.mxu0 0.0
        %v2071 = vand.u32 %v353, 4294901760
        %2072 = vmatpush1.msra.mxu0 %v2071
        %2073 = vmatprep.subr.mxu0 0.0
        %v2074 = vand.u32 %v354, 4294901760
        %2075 = vmatpush1.msra.mxu0 %v2074
        %2076 = vmatprep.subr.mxu0 0.0
        %v2077 = vand.u32 %v355, 4294901760
        %2078 = vmatpush1.msra.mxu0 %v2077
        %2079 = vmatprep.subr.mxu0 0.0
        %v2080 = vand.u32 %v356, 4294901760
        %2081 = vmatpush1.msra.mxu0 %v2080
        %2082 = vmatprep.subr.mxu0 0.0
        %v2083 = vand.u32 %v357, 4294901760
        %2084 = vmatpush1.msra.mxu0 %v2083
        %2085 = vmatprep.subr.mxu0 0.0
        %v2086 = vand.u32 %v358, 4294901760
        %2087 = vmatpush1.msra.mxu0 %v2086
        %2088 = vmatprep.subr.mxu0 0.0
        %v2089 = vand.u32 %v359, 4294901760
        %2090 = vmatpush1.msra.mxu0 %v2089
        %2091 = vmatprep.subr.mxu0 0.0
        %v2092 = vand.u32 %v360, 4294901760
        %2093 = vmatpush1.msra.mxu0 %v2092
        %2094 = vmatprep.subr.mxu0 0.0
        %v2095 = vand.u32 %v361, 4294901760
        %2096 = vmatpush1.msra.mxu0 %v2095
        %2097 = vmatprep.subr.mxu0 0.0
        %v2098 = vand.u32 %v362, 4294901760
        %2099 = vmatpush1.msra.mxu0 %v2098
        %2100 = vmatprep.subr.mxu0 0.0
        %v2101 = vand.u32 %v363, 4294901760
        %2102 = vmatpush1.msra.mxu0 %v2101
        %2103 = vmatprep.subr.mxu0 0.0
        %v2104 = vand.u32 %v364, 4294901760
        %2105 = vmatpush1.msra.mxu0 %v2104
        %2106 = vmatprep.subr.mxu0 0.0
        %v2107 = vand.u32 %v365, 4294901760
        %2108 = vmatpush1.msra.mxu0 %v2107
        %2109 = vmatprep.subr.mxu0 0.0
        %v2110 = vand.u32 %v366, 4294901760
        %2111 = vmatpush1.msra.mxu0 %v2110
        %2112 = vmatprep.subr.mxu0 0.0
        %v2113 = vand.u32 %v367, 4294901760
        %2114 = vmatpush1.msra.mxu0 %v2113
        %2115 = vmatprep.subr.mxu0 0.0
        %v2116 = vand.u32 %v368, 4294901760
        %2117 = vmatpush1.msra.mxu0 %v2116
        %2118 = vmatprep.subr.mxu0 0.0
        %2119 = vmatpush1.msra.mxu0 0.0
        %2120 = vmatprep.subr.mxu0 0.0
        %2121 = vmatpush1.msra.mxu0 0.0
        %2122 = vmatprep.subr.mxu0 0.0
        %2123 = vmatpush1.msra.mxu0 0.0
        %2124 = vmatprep.subr.mxu0 0.0
        %2125 = vmatpush1.msra.mxu0 0.0
        %2126 = vmatprep.subr.mxu0 0.0
        %2127 = vmatpush1.msra.mxu0 0.0
        %2128 = vmatprep.subr.mxu0 0.0
        %2129 = vmatpush1.msra.mxu0 0.0
        %2130 = vmatprep.subr.mxu0 0.0
        %2131 = vmatpush1.msra.mxu0 0.0
        %2132 = vmatprep.subr.mxu0 0.0
        %2133 = vmatpush1.msra.mxu0 0.0
        %2134 = vmatprep.subr.mxu0 0.0
        %2135 = vmatpush1.msra.mxu0 0.0
        %2136 = vmatprep.subr.mxu0 0.0
        %2137 = vmatpush1.msra.mxu0 0.0
        %2138 = vmatprep.subr.mxu0 0.0
        %2139 = vmatpush1.msra.mxu0 0.0
        %2140 = vmatprep.subr.mxu0 0.0
        %2141 = vmatpush1.msra.mxu0 0.0
        %2142 = vmatprep.subr.mxu0 0.0
        %2143 = vmatpush1.msra.mxu0 0.0
        %2144 = vmatprep.subr.mxu0 0.0
        %2145 = vmatpush1.msra.mxu0 0.0
        %2146 = vmatprep.subr.mxu0 0.0
        %2147 = vmatpush1.msra.mxu0 0.0
        %2148 = vmatprep.subr.mxu0 0.0
        %2149 = vmatpush1.msra.mxu0 0.0
        %2150 = vmatprep.mubr.f32.mxu0 0.0
        %v2151 = vand.u32 %v320, 4294901760
        %2152 = vmatmul.mubr.f32.gmra.mrb[0].mxu0 %v2151
        %v2153 = vpop.f32.mrb[0].mxu0
        %v2154 = vadd.f32 %v1881, %v2153
        %v2155 = vpop.f32.mrb[0].mxu0
        %2156 = vmatprep.mubr.f32.mxu0 0.0
        %v2157 = vand.u32 %v321, 4294901760
        %2158 = vmatmul.mubr.f32.gmra.mrb[0].mxu0 %v2157
        %v2159 = vpop.f32.mrb[0].mxu0
        %v2160 = vadd.f32 %v1887, %v2159
        %v2161 = vpop.f32.mrb[0].mxu0
        %2162 = vmatprep.mubr.f32.mxu0 0.0
        %v2163 = vand.u32 %v322, 4294901760
        %2164 = vmatmul.mubr.f32.gmra.mrb[0].mxu0 %v2163
        %v2165 = vpop.f32.mrb[0].mxu0
        %v2166 = vadd.f32 %v1893, %v2165
        %v2167 = vpop.f32.mrb[0].mxu0
        %2168 = vmatprep.mubr.f32.mxu0 0.0
        %v2169 = vand.u32 %v323, 4294901760
        %2170 = vmatmul.mubr.f32.gmra.mrb[0].mxu0 %v2169
        %v2171 = vpop.f32.mrb[0].mxu0
        %v2172 = vadd.f32 %v1899, %v2171
        %v2173 = vpop.f32.mrb[0].mxu0
        %2174 = vmatprep.mubr.f32.mxu0 0.0
        %v2175 = vand.u32 %v324, 4294901760
        %2176 = vmatmul.mubr.f32.gmra.mrb[0].mxu0 %v2175
        %v2177 = vpop.f32.mrb[0].mxu0
        %v2178 = vadd.f32 %v1905, %v2177
        %v2179 = vpop.f32.mrb[0].mxu0
        %2180 = vmatprep.mubr.f32.mxu0 0.0
        %v2181 = vand.u32 %v325, 4294901760
        %2182 = vmatmul.mubr.f32.gmra.mrb[0].mxu0 %v2181
        %v2183 = vpop.f32.mrb[0].mxu0
        %v2184 = vadd.f32 %v1911, %v2183
        %v2185 = vpop.f32.mrb[0].mxu0
        %2186 = vmatprep.mubr.f32.mxu0 0.0
        %v2187 = vand.u32 %v326, 4294901760
        %2188 = vmatmul.mubr.f32.gmra.mrb[0].mxu0 %v2187
        %v2189 = vpop.f32.mrb[0].mxu0
        %v2190 = vadd.f32 %v1917, %v2189
        %v2191 = vpop.f32.mrb[0].mxu0
        %2192 = vmatprep.mubr.f32.mxu0 0.0
        %v2193 = vand.u32 %v327, 4294901760
        %2194 = vmatmul.mubr.f32.gmra.mrb[0].mxu0 %v2193
        %v2195 = vpop.f32.mrb[0].mxu0
        %v2196 = vadd.f32 %v1923, %v2195
        %v2197 = vpop.f32.mrb[0].mxu0
        %2198 = vmatprep.mubr.f32.mxu0 0.0
        %v2199 = vand.u32 %v328, 4294901760
        %2200 = vmatmul.mubr.f32.gmra.mrb[0].mxu0 %v2199
        %v2201 = vpop.f32.mrb[0].mxu0
        %v2202 = vadd.f32 %v1929, %v2201
        %v2203 = vpop.f32.mrb[0].mxu0
        %2204 = vmatprep.mubr.f32.mxu0 0.0
        %v2205 = vand.u32 %v329, 4294901760
        %2206 = vmatmul.mubr.f32.gmra.mrb[0].mxu0 %v2205
        %v2207 = vpop.f32.mrb[0].mxu0
        %v2208 = vadd.f32 %v1935, %v2207
        %v2209 = vpop.f32.mrb[0].mxu0
        %2210 = vmatprep.mubr.f32.mxu0 0.0
        %v2211 = vand.u32 %v330, 4294901760
        %2212 = vmatmul.mubr.f32.gmra.mrb[0].mxu0 %v2211
        %v2213 = vpop.f32.mrb[0].mxu0
        %v2214 = vadd.f32 %v1941, %v2213
        %v2215 = vpop.f32.mrb[0].mxu0
        %2216 = vmatprep.mubr.f32.mxu0 0.0
        %v2217 = vand.u32 %v331, 4294901760
        %2218 = vmatmul.mubr.f32.gmra.mrb[0].mxu0 %v2217
        %v2219 = vpop.f32.mrb[0].mxu0
        %v2220 = vadd.f32 %v1947, %v2219
        %v2221 = vpop.f32.mrb[0].mxu0
        %2222 = vmatprep.mubr.f32.mxu0 0.0
        %v2223 = vand.u32 %v332, 4294901760
        %2224 = vmatmul.mubr.f32.gmra.mrb[0].mxu0 %v2223
        %v2225 = vpop.f32.mrb[0].mxu0
        %v2226 = vadd.f32 %v1953, %v2225
        %v2227 = vpop.f32.mrb[0].mxu0
        %2228 = vmatprep.mubr.f32.mxu0 0.0
        %v2229 = vand.u32 %v333, 4294901760
        %2230 = vmatmul.mubr.f32.gmra.mrb[0].mxu0 %v2229
        %v2231 = vpop.f32.mrb[0].mxu0
        %v2232 = vadd.f32 %v1959, %v2231
        %v2233 = vpop.f32.mrb[0].mxu0
        %2234 = vmatprep.mubr.f32.mxu0 0.0
        %v2235 = vand.u32 %v334, 4294901760
        %2236 = vmatmul.mubr.f32.gmra.mrb[0].mxu0 %v2235
        %v2237 = vpop.f32.mrb[0].mxu0
        %v2238 = vadd.f32 %v1965, %v2237
        %v2239 = vpop.f32.mrb[0].mxu0
        %2240 = vmatprep.mubr.f32.mxu0 0.0
        %v2241 = vand.u32 %v335, 4294901760
        %2242 = vmatmul.mubr.f32.gmra.mrb[0].mxu0 %v2241
        %v2243 = vpop.f32.mrb[0].mxu0
        %v2244 = vadd.f32 %v1971, %v2243
        %v2245 = vpop.f32.mrb[0].mxu0
        %2246 = vmatprep.mubr.f32.mxu0 0.0
        %v2247 = vand.u32 %v336, 4294901760
        %2248 = vmatmul.mubr.f32.gmra.mrb[0].mxu0 %v2247
        %v2249 = vpop.f32.mrb[0].mxu0
        %v2250 = vadd.f32 %v1977, %v2249
        %v2251 = vpop.f32.mrb[0].mxu0
        %2252 = vmatprep.mubr.f32.mxu0 0.0
        %v2253 = vand.u32 %v337, 4294901760
        %2254 = vmatmul.mubr.f32.gmra.mrb[0].mxu0 %v2253
        %v2255 = vpop.f32.mrb[0].mxu0
        %v2256 = vadd.f32 %v1983, %v2255
        %v2257 = vpop.f32.mrb[0].mxu0
        %2258 = vmatprep.mubr.f32.mxu0 0.0
        %v2259 = vand.u32 %v338, 4294901760
        %2260 = vmatmul.mubr.f32.gmra.mrb[0].mxu0 %v2259
        %v2261 = vpop.f32.mrb[0].mxu0
        %v2262 = vadd.f32 %v1989, %v2261
        %v2263 = vpop.f32.mrb[0].mxu0
        %2264 = vmatprep.mubr.f32.mxu0 0.0
        %v2265 = vand.u32 %v339, 4294901760
        %2266 = vmatmul.mubr.f32.gmra.mrb[0].mxu0 %v2265
        %v2267 = vpop.f32.mrb[0].mxu0
        %v2268 = vadd.f32 %v1995, %v2267
        %v2269 = vpop.f32.mrb[0].mxu0
        %2270 = vmatprep.mubr.f32.mxu0 0.0
        %v2271 = vand.u32 %v340, 4294901760
        %2272 = vmatmul.mubr.f32.gmra.mrb[0].mxu0 %v2271
        %v2273 = vpop.f32.mrb[0].mxu0
        %v2274 = vadd.f32 %v2001, %v2273
        %v2275 = vpop.f32.mrb[0].mxu0
        %2276 = vmatprep.mubr.f32.mxu0 0.0
        %v2277 = vand.u32 %v341, 4294901760
        %2278 = vmatmul.mubr.f32.gmra.mrb[0].mxu0 %v2277
        %v2279 = vpop.f32.mrb[0].mxu0
        %v2280 = vadd.f32 %v2007, %v2279
        %v2281 = vpop.f32.mrb[0].mxu0
        %2282 = vmatprep.mubr.f32.mxu0 0.0
        %v2283 = vand.u32 %v342, 4294901760
        %2284 = vmatmul.mubr.f32.gmra.mrb[0].mxu0 %v2283
        %v2285 = vpop.f32.mrb[0].mxu0
        %v2286 = vadd.f32 %v2013, %v2285
        %v2287 = vpop.f32.mrb[0].mxu0
        %2288 = vmatprep.mubr.f32.mxu0 0.0
        %v2289 = vand.u32 %v343, 4294901760
        %2290 = vmatmul.mubr.f32.gmra.mrb[0].mxu0 %v2289
        %v2291 = vpop.f32.mrb[0].mxu0
        %v2292 = vadd.f32 %v2019, %v2291
        %v2293 = vpop.f32.mrb[0].mxu0
        %2294 = vmatprep.mubr.f32.mxu0 0.0
        %v2295 = vand.u32 %v344, 4294901760
        %2296 = vmatmul.mubr.f32.gmra.mrb[0].mxu0 %v2295
        %v2297 = vpop.f32.mrb[0].mxu0
        %v2298 = vadd.f32 %v2025, %v2297
        %v2299 = vpop.f32.mrb[0].mxu0
        %2300 = vmatprep.mubr.f32.mxu0 0.0
        %v2301 = vand.u32 %v345, 4294901760
        %2302 = vmatmul.mubr.f32.gmra.mrb[0].mxu0 %v2301
        %v2303 = vpop.f32.mrb[0].mxu0
        %v2304 = vadd.f32 %v2031, %v2303
        %v2305 = vpop.f32.mrb[0].mxu0
        %2306 = vmatprep.mubr.f32.mxu0 0.0
        %v2307 = vand.u32 %v346, 4294901760
        %2308 = vmatmul.mubr.f32.gmra.mrb[0].mxu0 %v2307
        %v2309 = vpop.f32.mrb[0].mxu0
        %v2310 = vadd.f32 %v2037, %v2309
        %v2311 = vpop.f32.mrb[0].mxu0
        %2312 = vmatprep.mubr.f32.mxu0 0.0
        %v2313 = vand.u32 %v347, 4294901760
        %2314 = vmatmul.mubr.f32.gmra.mrb[0].mxu0 %v2313
        %v2315 = vpop.f32.mrb[0].mxu0
        %v2316 = vadd.f32 %v2043, %v2315
        %v2317 = vpop.f32.mrb[0].mxu0
        %2318 = vmatprep.mubr.f32.mxu0 0.0
        %v2319 = vand.u32 %v348, 4294901760
        %2320 = vmatmul.mubr.f32.gmra.mrb[0].mxu0 %v2319
        %v2321 = vpop.f32.mrb[0].mxu0
        %v2322 = vadd.f32 %v2049, %v2321
        %v2323 = vpop.f32.mrb[0].mxu0
        %2324 = vmatprep.mubr.f32.mxu0 0.0
        %v2325 = vand.u32 %v349, 4294901760
        %2326 = vmatmul.mubr.f32.gmra.mrb[0].mxu0 %v2325
        %v2327 = vpop.f32.mrb[0].mxu0
        %v2328 = vadd.f32 %v2055, %v2327
        %v2329 = vpop.f32.mrb[0].mxu0
        %2330 = vmatprep.mubr.f32.mxu0 0.0
        %v2331 = vand.u32 %v350, 4294901760
        %2332 = vmatmul.mubr.f32.gmra.mrb[0].mxu0 %v2331
        %v2333 = vpop.f32.mrb[0].mxu0
        %v2334 = vadd.f32 %v2061, %v2333
        %v2335 = vpop.f32.mrb[0].mxu0
        %2336 = vmatprep.mubr.f32.mxu0 0.0
        %v2337 = vand.u32 %v351, 4294901760
        %2338 = vmatmul.mubr.f32.gmra.mrb[0].mxu0 %v2337
        %v2339 = vpop.f32.mrb[0].mxu0
        %v2340 = vadd.f32 %v2067, %v2339
        %v2341 = vpop.f32.mrb[0].mxu0
        %2342 = vdwg.mxu0
        %v2343 = vadd.f32 %v288, %v2154
        %v2344 = vadd.f32 %v289, %v2160
        %v2345 = vadd.f32 %v290, %v2166
        %v2346 = vadd.f32 %v291, %v2172
        %v2347 = vadd.f32 %v292, %v2178
        %v2348 = vadd.f32 %v293, %v2184
        %v2349 = vadd.f32 %v294, %v2190
        %v2350 = vadd.f32 %v295, %v2196
        %v2351 = vadd.f32 %v296, %v2202
        %v2352 = vadd.f32 %v297, %v2208
        %v2353 = vadd.f32 %v298, %v2214
        %v2354 = vadd.f32 %v299, %v2220
        %v2355 = vadd.f32 %v300, %v2226
        %v2356 = vadd.f32 %v301, %v2232
        %v2357 = vadd.f32 %v302, %v2238
        %v2358 = vadd.f32 %v303, %v2244
        %v2359 = vadd.f32 %v304, %v2250
        %v2360 = vadd.f32 %v305, %v2256
        %v2361 = vadd.f32 %v306, %v2262
        %v2362 = vadd.f32 %v307, %v2268
        %v2363 = vadd.f32 %v308, %v2274
        %v2364 = vadd.f32 %v309, %v2280
        %v2365 = vadd.f32 %v310, %v2286
        %v2366 = vadd.f32 %v311, %v2292
        %v2367 = vadd.f32 %v312, %v2298
        %v2368 = vadd.f32 %v313, %v2304
        %v2369 = vadd.f32 %v314, %v2310
        %v2370 = vadd.f32 %v315, %v2316
        %v2371 = vadd.f32 %v316, %v2322
        %v2372 = vadd.f32 %v317, %v2328
        %v2373 = vadd.f32 %v318, %v2334
        %v2374 = vadd.f32 %v319, %v2340
        %2375 = vst [vmem:[#allocation2] sm:$0xff] %v2343
        %2376 = vst [vmem:[#allocation2 + $0x8] sm:$0xff] %v2344
        %2377 = vst [vmem:[#allocation2 + $0x10] sm:$0xff] %v2345
        %2378 = vst [vmem:[#allocation2 + $0x18] sm:$0xff] %v2346
        %2379 = vst [vmem:[#allocation2 + $0x20] sm:$0xff] %v2347
        %2380 = vst [vmem:[#allocation2 + $0x28] sm:$0xff] %v2348
        %2381 = vst [vmem:[#allocation2 + $0x30] sm:$0xff] %v2349
        %2382 = vst [vmem:[#allocation2 + $0x38] sm:$0xff] %v2350
        %2383 = vst [vmem:[#allocation2 + $0x40] sm:$0xff] %v2351
        %2384 = vst [vmem:[#allocation2 + $0x48] sm:$0xff] %v2352
        %2385 = vst [vmem:[#allocation2 + $0x50] sm:$0xff] %v2353
        %2386 = vst [vmem:[#allocation2 + $0x58] sm:$0xff] %v2354
        %2387 = vst [vmem:[#allocation2 + $0x60] sm:$0xff] %v2355
        %2388 = vst [vmem:[#allocation2 + $0x68] sm:$0xff] %v2356
        %2389 = vst [vmem:[#allocation2 + $0x70] sm:$0xff] %v2357
        %2390 = vst [vmem:[#allocation2 + $0x78] sm:$0xff] %v2358
        %2391 = vst [vmem:[#allocation2 + $0x80] sm:$0xff] %v2359
        %2392 = vst [vmem:[#allocation2 + $0x88] sm:$0xff] %v2360
        %2393 = vst [vmem:[#allocation2 + $0x90] sm:$0xff] %v2361
        %2394 = vst [vmem:[#allocation2 + $0x98] sm:$0xff] %v2362
        %2395 = vst [vmem:[#allocation2 + $0xa0] sm:$0xff] %v2363
        %2396 = vst [vmem:[#allocation2 + $0xa8] sm:$0xff] %v2364
        %2397 = vst [vmem:[#allocation2 + $0xb0] sm:$0xff] %v2365
        %2398 = vst [vmem:[#allocation2 + $0xb8] sm:$0xff] %v2366
        %2399 = vst [vmem:[#allocation2 + $0xc0] sm:$0xff] %v2367
        %2400 = vst [vmem:[#allocation2 + $0xc8] sm:$0xff] %v2368
        %2401 = vst [vmem:[#allocation2 + $0xd0] sm:$0xff] %v2369
        %2402 = vst [vmem:[#allocation2 + $0xd8] sm:$0xff] %v2370
        %2403 = vst [vmem:[#allocation2 + $0xe0] sm:$0xff] %v2371
        %2404 = vst [vmem:[#allocation2 + $0xe8] sm:$0xff] %v2372
        %2405 = vst [vmem:[#allocation2 + $0xf0] sm:$0xff] %v2373
        %2406 = vst [vmem:[#allocation2 + $0xf8] sm:$0xff] %v2374
        // Predicated region
        $region45: #{tpu_custom_call.1} parent=31 // pred_check
          %p2407 = pneg %p251
        $region46: #{tpu_custom_call.1} parent=31 // pred_check_branch
          %2409 = sbr.rel (%p2407) target = $region48
        $region47: #{tpu_custom_call.1} parent=31 // pred_region
          %v2410 = vld [vmem:[#allocation2] sm:$0xff]
          %v2411 = vld [vmem:[#allocation2 + $0x8] sm:$0xff]
          %v2412 = vld [vmem:[#allocation2 + $0x10] sm:$0xff]
          %v2413 = vld [vmem:[#allocation2 + $0x18] sm:$0xff]
          %v2414 = vld [vmem:[#allocation2 + $0x20] sm:$0xff]
          %v2415 = vld [vmem:[#allocation2 + $0x28] sm:$0xff]
          %v2416 = vld [vmem:[#allocation2 + $0x30] sm:$0xff]
          %v2417 = vld [vmem:[#allocation2 + $0x38] sm:$0xff]
          %v2418 = vld [vmem:[#allocation2 + $0x40] sm:$0xff]
          %v2419 = vld [vmem:[#allocation2 + $0x48] sm:$0xff]
          %v2420 = vld [vmem:[#allocation2 + $0x50] sm:$0xff]
          %v2421 = vld [vmem:[#allocation2 + $0x58] sm:$0xff]
          %v2422 = vld [vmem:[#allocation2 + $0x60] sm:$0xff]
          %v2423 = vld [vmem:[#allocation2 + $0x68] sm:$0xff]
          %v2424 = vld [vmem:[#allocation2 + $0x70] sm:$0xff]
          %v2425 = vld [vmem:[#allocation2 + $0x78] sm:$0xff]
          %v2426 = vld [vmem:[#allocation2 + $0x80] sm:$0xff]
          %v2427 = vld [vmem:[#allocation2 + $0x88] sm:$0xff]
          %v2428 = vld [vmem:[#allocation2 + $0x90] sm:$0xff]
          %v2429 = vld [vmem:[#allocation2 + $0x98] sm:$0xff]
          %v2430 = vld [vmem:[#allocation2 + $0xa0] sm:$0xff]
          %v2431 = vld [vmem:[#allocation2 + $0xa8] sm:$0xff]
          %v2432 = vld [vmem:[#allocation2 + $0xb0] sm:$0xff]
          %v2433 = vld [vmem:[#allocation2 + $0xb8] sm:$0xff]
          %v2434 = vld [vmem:[#allocation2 + $0xc0] sm:$0xff]
          %v2435 = vld [vmem:[#allocation2 + $0xc8] sm:$0xff]
          %v2436 = vld [vmem:[#allocation2 + $0xd0] sm:$0xff]
          %v2437 = vld [vmem:[#allocation2 + $0xd8] sm:$0xff]
          %v2438 = vld [vmem:[#allocation2 + $0xe0] sm:$0xff]
          %v2439 = vld [vmem:[#allocation2 + $0xe8] sm:$0xff]
          %v2440 = vld [vmem:[#allocation2 + $0xf0] sm:$0xff]
          %v2441 = vld [vmem:[#allocation2 + $0xf8] sm:$0xff]
          %v2442 = vld [vmem:[%s249] sm:$0x1]
          %v2444 = vlaneseq
          %v2445 = vshrl.u32 %v2444, 7
          %v2446 = vsub.s32 0, %v2445
          %v2447 = vrot.slane %v2442, %v2446
          %v2449 = vadd.f32 %v2410, %v2447
          %v2450 = vadd.f32 %v2411, %v2447
          %v2451 = vadd.f32 %v2412, %v2447
          %v2452 = vadd.f32 %v2413, %v2447
          %v2453 = vadd.f32 %v2414, %v2447
          %v2454 = vadd.f32 %v2415, %v2447
          %v2455 = vadd.f32 %v2416, %v2447
          %v2456 = vadd.f32 %v2417, %v2447
          %v2457 = vadd.f32 %v2418, %v2447
          %v2458 = vadd.f32 %v2419, %v2447
          %v2459 = vadd.f32 %v2420, %v2447
          %v2460 = vadd.f32 %v2421, %v2447
          %v2461 = vadd.f32 %v2422, %v2447
          %v2462 = vadd.f32 %v2423, %v2447
          %v2463 = vadd.f32 %v2424, %v2447
          %v2464 = vadd.f32 %v2425, %v2447
          %v2465 = vadd.f32 %v2426, %v2447
          %v2466 = vadd.f32 %v2427, %v2447
          %v2467 = vadd.f32 %v2428, %v2447
          %v2468 = vadd.f32 %v2429, %v2447
          %v2469 = vadd.f32 %v2430, %v2447
          %v2470 = vadd.f32 %v2431, %v2447
          %v2471 = vadd.f32 %v2432, %v2447
          %v2472 = vadd.f32 %v2433, %v2447
          %v2473 = vadd.f32 %v2434, %v2447
          %v2474 = vadd.f32 %v2435, %v2447
          %v2475 = vadd.f32 %v2436, %v2447
          %v2476 = vadd.f32 %v2437, %v2447
          %v2477 = vadd.f32 %v2438, %v2447
          %v2478 = vadd.f32 %v2439, %v2447
          %v2479 = vadd.f32 %v2440, %v2447
          %v2480 = vadd.f32 %v2441, %v2447
          %2481 = vst [vmem:[%s245] sm:$0xff] %v2449
          %2482 = vst [vmem:[%s245 + $0x8] sm:$0xff] %v2450
          %2483 = vst [vmem:[%s245 + $0x10] sm:$0xff] %v2451
          %2484 = vst [vmem:[%s245 + $0x18] sm:$0xff] %v2452
          %2485 = vst [vmem:[%s245 + $0x20] sm:$0xff] %v2453
          %2486 = vst [vmem:[%s245 + $0x28] sm:$0xff] %v2454
          %2487 = vst [vmem:[%s245 + $0x30] sm:$0xff] %v2455
          %2488 = vst [vmem:[%s245 + $0x38] sm:$0xff] %v2456
          %2489 = vst [vmem:[%s245 + $0x40] sm:$0xff] %v2457
          %2490 = vst [vmem:[%s245 + $0x48] sm:$0xff] %v2458
          %2491 = vst [vmem:[%s245 + $0x50] sm:$0xff] %v2459
          %2492 = vst [vmem:[%s245 + $0x58] sm:$0xff] %v2460
          %2493 = vst [vmem:[%s245 + $0x60] sm:$0xff] %v2461
          %2494 = vst [vmem:[%s245 + $0x68] sm:$0xff] %v2462
          %2495 = vst [vmem:[%s245 + $0x70] sm:$0xff] %v2463
          %2496 = vst [vmem:[%s245 + $0x78] sm:$0xff] %v2464
          %2497 = vst [vmem:[%s245 + $0x80] sm:$0xff] %v2465
          %2498 = vst [vmem:[%s245 + $0x88] sm:$0xff] %v2466
          %2499 = vst [vmem:[%s245 + $0x90] sm:$0xff] %v2467
          %2500 = vst [vmem:[%s245 + $0x98] sm:$0xff] %v2468
          %2501 = vst [vmem:[%s245 + $0xa0] sm:$0xff] %v2469
          %2502 = vst [vmem:[%s245 + $0xa8] sm:$0xff] %v2470
          %2503 = vst [vmem:[%s245 + $0xb0] sm:$0xff] %v2471
          %2504 = vst [vmem:[%s245 + $0xb8] sm:$0xff] %v2472
          %2505 = vst [vmem:[%s245 + $0xc0] sm:$0xff] %v2473
          %2506 = vst [vmem:[%s245 + $0xc8] sm:$0xff] %v2474
          %2507 = vst [vmem:[%s245 + $0xd0] sm:$0xff] %v2475
          %2508 = vst [vmem:[%s245 + $0xd8] sm:$0xff] %v2476
          %2509 = vst [vmem:[%s245 + $0xe0] sm:$0xff] %v2477
          %2510 = vst [vmem:[%s245 + $0xe8] sm:$0xff] %v2478
          %2511 = vst [vmem:[%s245 + $0xf0] sm:$0xff] %v2479
          %2512 = vst [vmem:[%s245 + $0xf8] sm:$0xff] %v2480
        $region48: #{tpu_custom_call.1} parent=31 // pred_fallthru
          _
        %s2513 = sand.u32 %s130, 1
        %s2514 = scalar_lea.sflag [#allocation5], %s2513
        %s2515 = sand.u32 %s130, 1
        %s2516 = smul.addr %s2515, 256
        %s2517 = scalar_lea.vmem [#allocation8], %s2516
        // Predicated region
        $region49: #{tpu_custom_call.1} parent=31 // pred_check
          %p2518 = pneg %p140
        $region50: #{tpu_custom_call.1} parent=31 // pred_check_branch
          %2520 = sbr.rel (%p2518) target = $region52
        $region51: #{tpu_custom_call.1} parent=31 // pred_region
          %s2521 = smul.u32 32, %s26
          %s2523 = ssub.s32 4096, 4096
          %2524 = vsyncadd %s2514, %s2523
          %s2525 = sadd.s32 %s27, %s2521
          %s2526 = smul.addr %s2525, 128
          %s2527 = scalar_lea.hbm %s3, %s2526
          %s2528 = sshll.u32 %s2517, 4
          %s2529 = int_to_ptr.vmem [resolvable:$true] %s2528
          %2534 = dma.vmem_to_hbm [thread:$0]  %s2529, 4096, %s2527, %s2514, 128, 128, 8
        $region52: #{tpu_custom_call.1} parent=31 // pred_fallthru
          _
      $region32: #{tpu_custom_call.1} parent=5 // pred_fallthru
        _
      %p2535 = scmp.le.s32.totalorder 2, %s16
      // Predicated region
      $region53: #{tpu_custom_call.1} parent=5 // pred_check
        %p2536 = pneg %p2535
      $region54: #{tpu_custom_call.1} parent=5 // pred_check_branch
        %2538 = sbr.rel (%p2536) target = $region56
      $region55: #{tpu_custom_call.1} parent=5 // pred_region
        %s2539 = ssub.s32 %s16, 2
        // Predicated region
        $region57: #{tpu_custom_call.1} parent=55 // pred_check
          %p2540 = pneg %p146
        $region58: #{tpu_custom_call.1} parent=55 // pred_check_branch
          %2542 = sbr.rel (%p2540) target = $region60
        $region59: #{tpu_custom_call.1} parent=55 // pred_region
          %s2543 = sand.u32 %s131, 1
          %s2544 = scalar_lea.sflag [#allocation5], %s2543
          %s2545 = sand.u32 %s131, 1
          %s2546 = smul.addr %s2545, 256
          %s2547 = scalar_lea.vmem [#allocation8], %s2546
          %2548 = dma.done %s2544, 4096
        $region60: #{tpu_custom_call.1} parent=55 // pred_fallthru
          _
      $region56: #{tpu_custom_call.1} parent=5 // pred_fallthru
        _
    $region6: #{tpu_custom_call.1} parent=1 // loop_footer
      %s20 = sadd.s32 1, %s16
    $region7: #{tpu_custom_call.1} parent=1 // loop_footer_branch
      %15 = sbr.rel target = $region3
    $region8: #{tpu_custom_call.1} parent=1 // loop_exit
      _
    %2549 = vsyncpa [#allocation4], 1
    %s2550 = scalar_lea.sflag [#allocation4], 1
    %2551 = vsyncpa %s2550, 1
    %2552 = vsyncpa [#allocation7], 1
    %2553 = vsyncpa [#allocation5], 1
    %s2554 = scalar_lea.sflag [#allocation5], 1
    %2555 = vsyncpa %s2554, 1

</llo_original>
